<compile_context>
chip_gen: v5e
topology: v5e:2x2
jax: 0.10.0
libtpu: 0.0.40
codegen_flags: <defaults>
</compile_context>

<pallas_src>
import jax
import jax.numpy as jnp
from jax import lax
from jax.experimental import pallas as pl
from jax.experimental.pallas import tpu as pltpu


# ----------------------------------------------------------------------------
# Fused whole-model kernel.
# Activations are flattened time-major: row t*B + b  <->  (timestep t, batch b).
# Kernel refs:
#   x(T*B,E), mask(T*B,1), idx(B,1),
#   [per non-last layer: wx4, wh4, b4, gamma, beta], [last layer: wx4, wh4, b4],
#   w1, b1, w2, b2,  out(B,C),  [scratch: one (T*B,H) VMEM slab per non-last layer]
# ----------------------------------------------------------------------------
def make_sst2_kernel(B, T, E, H_list, C, eps=1e-5):
    n_layers = len(H_list)

    def kernel(*refs):
        x_ref, mask_ref, idx_ref = refs[0], refs[1], refs[2]
        pos = 3
        layer_refs = []
        for li in range(n_layers):
            n = 3 if li == n_layers - 1 else 5
            layer_refs.append(refs[pos:pos + n])
            pos += n
        w1_ref, b1_ref, w2_ref, b2_ref = refs[pos:pos + 4]
        pos += 4
        out_ref = refs[pos]
        scratch_refs = refs[pos + 1:]

        mask = mask_ref[...]            # (T*B, 1)
        idx = idx_ref[...]              # (B, 1) int32
        x = x_ref[...]                  # (T*B, E) current layer input (in vregs)

        cls = None
        for li in range(n_layers):
            last = (li == n_layers - 1)
            H = H_list[li]
            if last:
                wx4_ref, wh4_ref, b4_ref = layer_refs[li]
            else:
                wx4_ref, wh4_ref, b4_ref, g_ref, bta_ref = layer_refs[li]

            wx4 = wx4_ref[...]          # (Din, 4H)
            wh4 = wh4_ref[...]          # (H,   4H)
            b4 = b4_ref[...]            # (1,   4H)   (bx + bh pre-summed)

            # Input projection for ALL timesteps in one MXU call.
            xproj = jnp.dot(x, wx4, preferred_element_type=jnp.float32) + b4

            h = jnp.zeros((B, H), jnp.float32)
            c = jnp.zeros((B, H), jnp.float32)
            hs = []
            # T is small and static -> full unroll, all static slices.
            for t in range(T):
                r0, r1 = t * B, (t + 1) * B
                gates = xproj[r0:r1, :] + jnp.dot(
                    h, wh4, preferred_element_type=jnp.float32)
                i_g = jax.nn.sigmoid(gates[:, 0:H])
                f_g = jax.nn.sigmoid(gates[:, H:2 * H])
                g_g = jnp.tanh(gates[:, 2 * H:3 * H])
                o_g = jax.nn.sigmoid(gates[:, 3 * H:4 * H])
                c = f_g * c + i_g * g_g
                h = o_g * jnp.tanh(c)
                hs.append(h)

            if not last:
                gamma = g_ref[...]      # (1, H)
                beta = bta_ref[...]     # (1, H)
                sref = scratch_refs[li]
                # Stage raw hidden states into a VMEM slab (static-offset stores),
                # then mask + LayerNorm vectorized over all T*B rows at once.
                for t in range(T):
                    sref[t * B:(t + 1) * B, :] = hs[t]
                hraw = sref[...]                      # (T*B, H)
                hm = hraw * mask
                mu = jnp.mean(hm, axis=-1, keepdims=True)
                var = jnp.mean(jnp.square(hm - mu), axis=-1, keepdims=True)
                x = ((hm - mu) * lax.rsqrt(var + eps)) * gamma + beta
            else:
                # cls token from UNMASKED hidden states (matches reference);
                # gather-free select: cls[b] = h_t[b] where t == idx[b].
                cls = jnp.zeros((B, H), jnp.float32)
                for t in range(T):
                    cls = jnp.where(idx == t, hs[t], cls)

        # Fused head: fc1 -> relu -> fc2 -> log_softmax.
        h1 = jnp.dot(cls, w1_ref[...], preferred_element_type=jnp.float32) + b1_ref[...]
        h1 = jnp.maximum(h1, 0.0)
        logits = jnp.dot(h1, w2_ref[...], preferred_element_type=jnp.float32) + b2_ref[...]
        m = jnp.max(logits, axis=-1, keepdims=True)
        s = logits - m
        lse = jnp.log(jnp.sum(jnp.exp(s), axis=-1, keepdims=True))
        out_ref[...] = s - lse

    return kernel


# ----------------------------------------------------------------------------
# parameter init (deterministic, PyTorch-ish uniform fan-in init) with the
# gate weights packed as (Din, 4H) / (Hh, 4H) fused matrices, order i|f|g|o.
# ----------------------------------------------------------------------------
def init_params(key, dict_size, hidden_dims, output_class):
    E = hidden_dims[0]
    keys = iter(jax.random.split(key, 128))

    def lin(k, din, dout):
        bound = 1.0 / float(din) ** 0.5
        kw, kb = jax.random.split(k)
        w = jax.random.uniform(kw, (din, dout), jnp.float32, -bound, bound)
        b = jax.random.uniform(kb, (1, dout), jnp.float32, -bound, bound)
        return w, b

    params = {"embed": jax.random.normal(next(keys), (dict_size, E), jnp.float32)}
    lstm_params, ln_params = [], []
    for i in range(len(hidden_dims)):
        din = E if i == 0 else hidden_dims[i]
        hh = hidden_dims[i - 1]   # mirrors the PyTorch constructor quirk
        H = hidden_dims[i]        # (h @ Wh4 shape-checks only when hh == H,
                                  #  same constraint the reference model has)
        wx_l, wh_l, b_l = [], [], []
        for _g in ("i", "f", "g", "o"):
            wx, bx = lin(next(keys), din, H)
            wh, bh = lin(next(keys), hh, H)
            wx_l.append(wx)
            wh_l.append(wh)
            b_l.append(bx + bh)   # the two Linear biases always add
        lstm_params.append({
            "wx4": jnp.concatenate(wx_l, axis=1),   # (Din, 4H)
            "wh4": jnp.concatenate(wh_l, axis=1),   # (Hh , 4H)
            "b4": jnp.concatenate(b_l, axis=1),     # (1,   4H)
        })
        ln_params.append({"gamma": jnp.ones((1, H), jnp.float32),
                          "beta": jnp.zeros((1, H), jnp.float32)})
    params["lstm"] = lstm_params
    params["ln"] = ln_params
    H_last = hidden_dims[-1]
    params["fc1_w"], params["fc1_b"] = lin(next(keys), H_last, H_last * 4)
    params["fc2_w"], params["fc2_b"] = lin(next(keys), H_last * 4, output_class)
    return params


# ----------------------------------------------------------------------------
# full forward (inference, return_inter=False): ONE pallas_call.
# ----------------------------------------------------------------------------
def sst2_forward(params, x_ids, attention_mask, nonzero_index):
    B, T = x_ids.shape
    E = params["embed"].shape[1]
    H_list = [p["wh4"].shape[1] // 4 for p in params["lstm"]]
    C = params["fc2_w"].shape[1]
    n_layers = len(H_list)

    # Embedding gather directly into the flattened time-major layout (T*B, E):
    # no activation transposes anywhere downstream.
    ids_flat = jnp.transpose(x_ids, (1, 0)).reshape(T * B)
    x = jnp.take(params["embed"], ids_flat, axis=0)                     # (T*B, E)
    mask_flat = jnp.transpose(attention_mask, (1, 0)).reshape(T * B, 1)
    mask_flat = mask_flat.astype(jnp.float32)
    idx = nonzero_index.astype(jnp.int32)                               # (B, 1)

    args = [x, mask_flat, idx]
    for i in range(n_layers):
        p = params["lstm"][i]
        args += [p["wx4"], p["wh4"], p["b4"]]
        if i < n_layers - 1:   # last layer's LayerNorm output is discarded
            args += [params["ln"][i]["gamma"], params["ln"][i]["beta"]]
    args += [params["fc1_w"], params["fc1_b"], params["fc2_w"], params["fc2_b"]]

    # TODO(synk): training-mode dropout (p=0.1) not modeled; inference identity.
    return pl.pallas_call(
        make_sst2_kernel(B, T, E, H_list, C),
        out_shape=jax.ShapeDtypeStruct((B, C), jnp.float32),
        scratch_shapes=[pltpu.VMEM((T * B, H_list[i]), jnp.float32)
                        for i in range(n_layers - 1)],
    )(*args)   # (B, C) log-probs


if __name__ == "__main__":
    B, T = 2, 8
    hidden_dims = [32, 32]
    dict_size = 50
    output_class = 2

    key = jax.random.PRNGKey(0)
    kp, kx = jax.random.split(key)
    params = init_params(kp, dict_size, hidden_dims, output_class)

    x_ids = jax.random.randint(kx, (B, T), 0, dict_size, dtype=jnp.int32)
    lengths = jnp.array([8, 5], dtype=jnp.int32)
    attention_mask = (jnp.arange(T)[None, :] < lengths[:, None]).astype(jnp.float32)
    nonzero_index = (lengths - 1)[:, None].astype(jnp.int32)   # (B, 1)

    out = jax.jit(sst2_forward)(params, x_ids, attention_mask, nonzero_index)
    out = jax.block_until_ready(out)
    assert out.shape == (B, output_class)
    assert bool(jnp.all(jnp.isfinite(out)))
    print("KERNEL_OK")
</pallas_src>

<mosaic_0001>
module attributes {stable_mosaic.version = 11 : i64} {
  func.func @kernel(%arg0: memref<16x32xf32, #tpu.memory_space<vmem>>, %arg1: memref<16x1xf32, #tpu.memory_space<vmem>>, %arg2: memref<2x1xi32, #tpu.memory_space<vmem>>, %arg3: memref<32x128xf32, #tpu.memory_space<vmem>>, %arg4: memref<32x128xf32, #tpu.memory_space<vmem>>, %arg5: memref<1x128xf32, #tpu.memory_space<vmem>>, %arg6: memref<1x32xf32, #tpu.memory_space<vmem>>, %arg7: memref<1x32xf32, #tpu.memory_space<vmem>>, %arg8: memref<32x128xf32, #tpu.memory_space<vmem>>, %arg9: memref<32x128xf32, #tpu.memory_space<vmem>>, %arg10: memref<1x128xf32, #tpu.memory_space<vmem>>, %arg11: memref<32x128xf32, #tpu.memory_space<vmem>>, %arg12: memref<1x128xf32, #tpu.memory_space<vmem>>, %arg13: memref<128x2xf32, #tpu.memory_space<vmem>>, %arg14: memref<1x2xf32, #tpu.memory_space<vmem>>, %arg15: memref<2x2xf32, #tpu.memory_space<vmem>>, %arg16: memref<16x32xf32, #tpu.memory_space<vmem>>) attributes {dimension_semantics = [], scalar_prefetch = 0 : i64, scratch_operands = 1 : i64, tpu.core_type = #tpu.core_type<tc>} {
    %c0 = arith.constant 0 : index
    %c0_0 = arith.constant 0 : index
    %0 = vector.load %arg1[%c0, %c0_0] : memref<16x1xf32, #tpu.memory_space<vmem>>, vector<16x1xf32>
    %c0_1 = arith.constant 0 : index
    %c0_2 = arith.constant 0 : index
    %1 = vector.load %arg2[%c0_1, %c0_2] : memref<2x1xi32, #tpu.memory_space<vmem>>, vector<2x1xi32>
    %c0_3 = arith.constant 0 : index
    %c0_4 = arith.constant 0 : index
    %2 = vector.load %arg0[%c0_3, %c0_4] : memref<16x32xf32, #tpu.memory_space<vmem>>, vector<16x32xf32>
    %c0_5 = arith.constant 0 : index
    %c0_6 = arith.constant 0 : index
    %3 = vector.load %arg3[%c0_5, %c0_6] : memref<32x128xf32, #tpu.memory_space<vmem>>, vector<32x128xf32>
    %c0_7 = arith.constant 0 : index
    %c0_8 = arith.constant 0 : index
    %4 = vector.load %arg4[%c0_7, %c0_8] : memref<32x128xf32, #tpu.memory_space<vmem>>, vector<32x128xf32>
    %c0_9 = arith.constant 0 : index
    %c0_10 = arith.constant 0 : index
    %5 = vector.load %arg5[%c0_9, %c0_10] : memref<1x128xf32, #tpu.memory_space<vmem>>, vector<1x128xf32>
    %cst = arith.constant dense<0.000000e+00> : vector<16x128xf32>
    %6 = tpu.matmul %2, %3, %cst {dimension_numbers = #tpu.dot_dimension_numbers<[1], [0], [0], [1], [0, 0, 1, 1], [], []>} : vector<16x32xf32>, vector<32x128xf32>, vector<16x128xf32> -> vector<16x128xf32>
    %7 = vector.broadcast %5 : vector<1x128xf32> to vector<16x128xf32>
    %8 = arith.addf %6, %7 : vector<16x128xf32>
    %cst_11 = arith.constant 0.000000e+00 : f32
    %9 = vector.broadcast %cst_11 : f32 to vector<2x32xf32>
    %cst_12 = arith.constant 0.000000e+00 : f32
    %10 = vector.broadcast %cst_12 : f32 to vector<2x32xf32>
    %11 = vector.extract_strided_slice %8 {offsets = [0, 0], sizes = [2, 128], strides = [1, 1]} : vector<16x128xf32> to vector<2x128xf32>
    %cst_13 = arith.constant dense<0.000000e+00> : vector<2x128xf32>
    %12 = tpu.matmul %9, %4, %cst_13 {dimension_numbers = #tpu.dot_dimension_numbers<[1], [0], [0], [1], [0, 0, 1, 1], [], []>} : vector<2x32xf32>, vector<32x128xf32>, vector<2x128xf32> -> vector<2x128xf32>
    %13 = arith.addf %11, %12 : vector<2x128xf32>
    %14 = vector.extract_strided_slice %13 {offsets = [0, 0], sizes = [2, 32], strides = [1, 1]} : vector<2x128xf32> to vector<2x32xf32>
    %15 = arith.negf %14 : vector<2x32xf32>
    %16 = math.exp %15 : vector<2x32xf32>
    %cst_14 = arith.constant 1.000000e+00 : f32
    %17 = vector.broadcast %cst_14 : f32 to vector<2x32xf32>
    %18 = arith.addf %17, %16 : vector<2x32xf32>
    %19 = arith.divf %17, %18 : vector<2x32xf32>
    %20 = vector.extract_strided_slice %13 {offsets = [0, 32], sizes = [2, 32], strides = [1, 1]} : vector<2x128xf32> to vector<2x32xf32>
    %21 = arith.negf %20 : vector<2x32xf32>
    %22 = math.exp %21 : vector<2x32xf32>
    %cst_15 = arith.constant 1.000000e+00 : f32
    %23 = vector.broadcast %cst_15 : f32 to vector<2x32xf32>
    %24 = arith.addf %23, %22 : vector<2x32xf32>
    %25 = arith.divf %23, %24 : vector<2x32xf32>
    %26 = vector.extract_strided_slice %13 {offsets = [0, 64], sizes = [2, 32], strides = [1, 1]} : vector<2x128xf32> to vector<2x32xf32>
    %27 = math.tanh %26 : vector<2x32xf32>
    %28 = vector.extract_strided_slice %13 {offsets = [0, 96], sizes = [2, 32], strides = [1, 1]} : vector<2x128xf32> to vector<2x32xf32>
    %29 = arith.negf %28 : vector<2x32xf32>
    %30 = math.exp %29 : vector<2x32xf32>
    %cst_16 = arith.constant 1.000000e+00 : f32
    %31 = vector.broadcast %cst_16 : f32 to vector<2x32xf32>
    %32 = arith.addf %31, %30 : vector<2x32xf32>
    %33 = arith.divf %31, %32 : vector<2x32xf32>
    %34 = arith.mulf %25, %10 : vector<2x32xf32>
    %35 = arith.mulf %19, %27 : vector<2x32xf32>
    %36 = arith.addf %34, %35 : vector<2x32xf32>
    %37 = math.tanh %36 : vector<2x32xf32>
    %38 = arith.mulf %33, %37 : vector<2x32xf32>
    %39 = vector.extract_strided_slice %8 {offsets = [2, 0], sizes = [2, 128], strides = [1, 1]} : vector<16x128xf32> to vector<2x128xf32>
    %cst_17 = arith.constant dense<0.000000e+00> : vector<2x128xf32>
    %40 = tpu.matmul %38, %4, %cst_17 {dimension_numbers = #tpu.dot_dimension_numbers<[1], [0], [0], [1], [0, 0, 1, 1], [], []>} : vector<2x32xf32>, vector<32x128xf32>, vector<2x128xf32> -> vector<2x128xf32>
    %41 = arith.addf %39, %40 : vector<2x128xf32>
    %42 = vector.extract_strided_slice %41 {offsets = [0, 0], sizes = [2, 32], strides = [1, 1]} : vector<2x128xf32> to vector<2x32xf32>
    %43 = arith.negf %42 : vector<2x32xf32>
    %44 = math.exp %43 : vector<2x32xf32>
    %cst_18 = arith.constant 1.000000e+00 : f32
    %45 = vector.broadcast %cst_18 : f32 to vector<2x32xf32>
    %46 = arith.addf %45, %44 : vector<2x32xf32>
    %47 = arith.divf %45, %46 : vector<2x32xf32>
    %48 = vector.extract_strided_slice %41 {offsets = [0, 32], sizes = [2, 32], strides = [1, 1]} : vector<2x128xf32> to vector<2x32xf32>
    %49 = arith.negf %48 : vector<2x32xf32>
    %50 = math.exp %49 : vector<2x32xf32>
    %cst_19 = arith.constant 1.000000e+00 : f32
    %51 = vector.broadcast %cst_19 : f32 to vector<2x32xf32>
    %52 = arith.addf %51, %50 : vector<2x32xf32>
    %53 = arith.divf %51, %52 : vector<2x32xf32>
    %54 = vector.extract_strided_slice %41 {offsets = [0, 64], sizes = [2, 32], strides = [1, 1]} : vector<2x128xf32> to vector<2x32xf32>
    %55 = math.tanh %54 : vector<2x32xf32>
    %56 = vector.extract_strided_slice %41 {offsets = [0, 96], sizes = [2, 32], strides = [1, 1]} : vector<2x128xf32> to vector<2x32xf32>
    %57 = arith.negf %56 : vector<2x32xf32>
    %58 = math.exp %57 : vector<2x32xf32>
    %cst_20 = arith.constant 1.000000e+00 : f32
    %59 = vector.broadcast %cst_20 : f32 to vector<2x32xf32>
    %60 = arith.addf %59, %58 : vector<2x32xf32>
    %61 = arith.divf %59, %60 : vector<2x32xf32>
    %62 = arith.mulf %53, %36 : vector<2x32xf32>
    %63 = arith.mulf %47, %55 : vector<2x32xf32>
    %64 = arith.addf %62, %63 : vector<2x32xf32>
    %65 = math.tanh %64 : vector<2x32xf32>
    %66 = arith.mulf %61, %65 : vector<2x32xf32>
    %67 = vector.extract_strided_slice %8 {offsets = [4, 0], sizes = [2, 128], strides = [1, 1]} : vector<16x128xf32> to vector<2x128xf32>
    %cst_21 = arith.constant dense<0.000000e+00> : vector<2x128xf32>
    %68 = tpu.matmul %66, %4, %cst_21 {dimension_numbers = #tpu.dot_dimension_numbers<[1], [0], [0], [1], [0, 0, 1, 1], [], []>} : vector<2x32xf32>, vector<32x128xf32>, vector<2x128xf32> -> vector<2x128xf32>
    %69 = arith.addf %67, %68 : vector<2x128xf32>
    %70 = vector.extract_strided_slice %69 {offsets = [0, 0], sizes = [2, 32], strides = [1, 1]} : vector<2x128xf32> to vector<2x32xf32>
    %71 = arith.negf %70 : vector<2x32xf32>
    %72 = math.exp %71 : vector<2x32xf32>
    %cst_22 = arith.constant 1.000000e+00 : f32
    %73 = vector.broadcast %cst_22 : f32 to vector<2x32xf32>
    %74 = arith.addf %73, %72 : vector<2x32xf32>
    %75 = arith.divf %73, %74 : vector<2x32xf32>
    %76 = vector.extract_strided_slice %69 {offsets = [0, 32], sizes = [2, 32], strides = [1, 1]} : vector<2x128xf32> to vector<2x32xf32>
    %77 = arith.negf %76 : vector<2x32xf32>
    %78 = math.exp %77 : vector<2x32xf32>
    %cst_23 = arith.constant 1.000000e+00 : f32
    %79 = vector.broadcast %cst_23 : f32 to vector<2x32xf32>
    %80 = arith.addf %79, %78 : vector<2x32xf32>
    %81 = arith.divf %79, %80 : vector<2x32xf32>
    %82 = vector.extract_strided_slice %69 {offsets = [0, 64], sizes = [2, 32], strides = [1, 1]} : vector<2x128xf32> to vector<2x32xf32>
    %83 = math.tanh %82 : vector<2x32xf32>
    %84 = vector.extract_strided_slice %69 {offsets = [0, 96], sizes = [2, 32], strides = [1, 1]} : vector<2x128xf32> to vector<2x32xf32>
    %85 = arith.negf %84 : vector<2x32xf32>
    %86 = math.exp %85 : vector<2x32xf32>
    %cst_24 = arith.constant 1.000000e+00 : f32
    %87 = vector.broadcast %cst_24 : f32 to vector<2x32xf32>
    %88 = arith.addf %87, %86 : vector<2x32xf32>
    %89 = arith.divf %87, %88 : vector<2x32xf32>
    %90 = arith.mulf %81, %64 : vector<2x32xf32>
    %91 = arith.mulf %75, %83 : vector<2x32xf32>
    %92 = arith.addf %90, %91 : vector<2x32xf32>
    %93 = math.tanh %92 : vector<2x32xf32>
    %94 = arith.mulf %89, %93 : vector<2x32xf32>
    %95 = vector.extract_strided_slice %8 {offsets = [6, 0], sizes = [2, 128], strides = [1, 1]} : vector<16x128xf32> to vector<2x128xf32>
    %cst_25 = arith.constant dense<0.000000e+00> : vector<2x128xf32>
    %96 = tpu.matmul %94, %4, %cst_25 {dimension_numbers = #tpu.dot_dimension_numbers<[1], [0], [0], [1], [0, 0, 1, 1], [], []>} : vector<2x32xf32>, vector<32x128xf32>, vector<2x128xf32> -> vector<2x128xf32>
    %97 = arith.addf %95, %96 : vector<2x128xf32>
    %98 = vector.extract_strided_slice %97 {offsets = [0, 0], sizes = [2, 32], strides = [1, 1]} : vector<2x128xf32> to vector<2x32xf32>
    %99 = arith.negf %98 : vector<2x32xf32>
    %100 = math.exp %99 : vector<2x32xf32>
    %cst_26 = arith.constant 1.000000e+00 : f32
    %101 = vector.broadcast %cst_26 : f32 to vector<2x32xf32>
    %102 = arith.addf %101, %100 : vector<2x32xf32>
    %103 = arith.divf %101, %102 : vector<2x32xf32>
    %104 = vector.extract_strided_slice %97 {offsets = [0, 32], sizes = [2, 32], strides = [1, 1]} : vector<2x128xf32> to vector<2x32xf32>
    %105 = arith.negf %104 : vector<2x32xf32>
    %106 = math.exp %105 : vector<2x32xf32>
    %cst_27 = arith.constant 1.000000e+00 : f32
    %107 = vector.broadcast %cst_27 : f32 to vector<2x32xf32>
    %108 = arith.addf %107, %106 : vector<2x32xf32>
    %109 = arith.divf %107, %108 : vector<2x32xf32>
    %110 = vector.extract_strided_slice %97 {offsets = [0, 64], sizes = [2, 32], strides = [1, 1]} : vector<2x128xf32> to vector<2x32xf32>
    %111 = math.tanh %110 : vector<2x32xf32>
    %112 = vector.extract_strided_slice %97 {offsets = [0, 96], sizes = [2, 32], strides = [1, 1]} : vector<2x128xf32> to vector<2x32xf32>
    %113 = arith.negf %112 : vector<2x32xf32>
    %114 = math.exp %113 : vector<2x32xf32>
    %cst_28 = arith.constant 1.000000e+00 : f32
    %115 = vector.broadcast %cst_28 : f32 to vector<2x32xf32>
    %116 = arith.addf %115, %114 : vector<2x32xf32>
    %117 = arith.divf %115, %116 : vector<2x32xf32>
    %118 = arith.mulf %109, %92 : vector<2x32xf32>
    %119 = arith.mulf %103, %111 : vector<2x32xf32>
    %120 = arith.addf %118, %119 : vector<2x32xf32>
    %121 = math.tanh %120 : vector<2x32xf32>
    %122 = arith.mulf %117, %121 : vector<2x32xf32>
    %123 = vector.extract_strided_slice %8 {offsets = [8, 0], sizes = [2, 128], strides = [1, 1]} : vector<16x128xf32> to vector<2x128xf32>
    %cst_29 = arith.constant dense<0.000000e+00> : vector<2x128xf32>
    %124 = tpu.matmul %122, %4, %cst_29 {dimension_numbers = #tpu.dot_dimension_numbers<[1], [0], [0], [1], [0, 0, 1, 1], [], []>} : vector<2x32xf32>, vector<32x128xf32>, vector<2x128xf32> -> vector<2x128xf32>
    %125 = arith.addf %123, %124 : vector<2x128xf32>
    %126 = vector.extract_strided_slice %125 {offsets = [0, 0], sizes = [2, 32], strides = [1, 1]} : vector<2x128xf32> to vector<2x32xf32>
    %127 = arith.negf %126 : vector<2x32xf32>
    %128 = math.exp %127 : vector<2x32xf32>
    %cst_30 = arith.constant 1.000000e+00 : f32
    %129 = vector.broadcast %cst_30 : f32 to vector<2x32xf32>
    %130 = arith.addf %129, %128 : vector<2x32xf32>
    %131 = arith.divf %129, %130 : vector<2x32xf32>
    %132 = vector.extract_strided_slice %125 {offsets = [0, 32], sizes = [2, 32], strides = [1, 1]} : vector<2x128xf32> to vector<2x32xf32>
    %133 = arith.negf %132 : vector<2x32xf32>
    %134 = math.exp %133 : vector<2x32xf32>
    %cst_31 = arith.constant 1.000000e+00 : f32
    %135 = vector.broadcast %cst_31 : f32 to vector<2x32xf32>
    %136 = arith.addf %135, %134 : vector<2x32xf32>
    %137 = arith.divf %135, %136 : vector<2x32xf32>
    %138 = vector.extract_strided_slice %125 {offsets = [0, 64], sizes = [2, 32], strides = [1, 1]} : vector<2x128xf32> to vector<2x32xf32>
    %139 = math.tanh %138 : vector<2x32xf32>
    %140 = vector.extract_strided_slice %125 {offsets = [0, 96], sizes = [2, 32], strides = [1, 1]} : vector<2x128xf32> to vector<2x32xf32>
    %141 = arith.negf %140 : vector<2x32xf32>
    %142 = math.exp %141 : vector<2x32xf32>
    %cst_32 = arith.constant 1.000000e+00 : f32
    %143 = vector.broadcast %cst_32 : f32 to vector<2x32xf32>
    %144 = arith.addf %143, %142 : vector<2x32xf32>
    %145 = arith.divf %143, %144 : vector<2x32xf32>
    %146 = arith.mulf %137, %120 : vector<2x32xf32>
    %147 = arith.mulf %131, %139 : vector<2x32xf32>
    %148 = arith.addf %146, %147 : vector<2x32xf32>
    %149 = math.tanh %148 : vector<2x32xf32>
    %150 = arith.mulf %145, %149 : vector<2x32xf32>
    %151 = vector.extract_strided_slice %8 {offsets = [10, 0], sizes = [2, 128], strides = [1, 1]} : vector<16x128xf32> to vector<2x128xf32>
    %cst_33 = arith.constant dense<0.000000e+00> : vector<2x128xf32>
    %152 = tpu.matmul %150, %4, %cst_33 {dimension_numbers = #tpu.dot_dimension_numbers<[1], [0], [0], [1], [0, 0, 1, 1], [], []>} : vector<2x32xf32>, vector<32x128xf32>, vector<2x128xf32> -> vector<2x128xf32>
    %153 = arith.addf %151, %152 : vector<2x128xf32>
    %154 = vector.extract_strided_slice %153 {offsets = [0, 0], sizes = [2, 32], strides = [1, 1]} : vector<2x128xf32> to vector<2x32xf32>
    %155 = arith.negf %154 : vector<2x32xf32>
    %156 = math.exp %155 : vector<2x32xf32>
    %cst_34 = arith.constant 1.000000e+00 : f32
    %157 = vector.broadcast %cst_34 : f32 to vector<2x32xf32>
    %158 = arith.addf %157, %156 : vector<2x32xf32>
    %159 = arith.divf %157, %158 : vector<2x32xf32>
    %160 = vector.extract_strided_slice %153 {offsets = [0, 32], sizes = [2, 32], strides = [1, 1]} : vector<2x128xf32> to vector<2x32xf32>
    %161 = arith.negf %160 : vector<2x32xf32>
    %162 = math.exp %161 : vector<2x32xf32>
    %cst_35 = arith.constant 1.000000e+00 : f32
    %163 = vector.broadcast %cst_35 : f32 to vector<2x32xf32>
    %164 = arith.addf %163, %162 : vector<2x32xf32>
    %165 = arith.divf %163, %164 : vector<2x32xf32>
    %166 = vector.extract_strided_slice %153 {offsets = [0, 64], sizes = [2, 32], strides = [1, 1]} : vector<2x128xf32> to vector<2x32xf32>
    %167 = math.tanh %166 : vector<2x32xf32>
    %168 = vector.extract_strided_slice %153 {offsets = [0, 96], sizes = [2, 32], strides = [1, 1]} : vector<2x128xf32> to vector<2x32xf32>
    %169 = arith.negf %168 : vector<2x32xf32>
    %170 = math.exp %169 : vector<2x32xf32>
    %cst_36 = arith.constant 1.000000e+00 : f32
    %171 = vector.broadcast %cst_36 : f32 to vector<2x32xf32>
    %172 = arith.addf %171, %170 : vector<2x32xf32>
    %173 = arith.divf %171, %172 : vector<2x32xf32>
    %174 = arith.mulf %165, %148 : vector<2x32xf32>
    %175 = arith.mulf %159, %167 : vector<2x32xf32>
    %176 = arith.addf %174, %175 : vector<2x32xf32>
    %177 = math.tanh %176 : vector<2x32xf32>
    %178 = arith.mulf %173, %177 : vector<2x32xf32>
    %179 = vector.extract_strided_slice %8 {offsets = [12, 0], sizes = [2, 128], strides = [1, 1]} : vector<16x128xf32> to vector<2x128xf32>
    %cst_37 = arith.constant dense<0.000000e+00> : vector<2x128xf32>
    %180 = tpu.matmul %178, %4, %cst_37 {dimension_numbers = #tpu.dot_dimension_numbers<[1], [0], [0], [1], [0, 0, 1, 1], [], []>} : vector<2x32xf32>, vector<32x128xf32>, vector<2x128xf32> -> vector<2x128xf32>
    %181 = arith.addf %179, %180 : vector<2x128xf32>
    %182 = vector.extract_strided_slice %181 {offsets = [0, 0], sizes = [2, 32], strides = [1, 1]} : vector<2x128xf32> to vector<2x32xf32>
    %183 = arith.negf %182 : vector<2x32xf32>
    %184 = math.exp %183 : vector<2x32xf32>
    %cst_38 = arith.constant 1.000000e+00 : f32
    %185 = vector.broadcast %cst_38 : f32 to vector<2x32xf32>
    %186 = arith.addf %185, %184 : vector<2x32xf32>
    %187 = arith.divf %185, %186 : vector<2x32xf32>
    %188 = vector.extract_strided_slice %181 {offsets = [0, 32], sizes = [2, 32], strides = [1, 1]} : vector<2x128xf32> to vector<2x32xf32>
    %189 = arith.negf %188 : vector<2x32xf32>
    %190 = math.exp %189 : vector<2x32xf32>
    %cst_39 = arith.constant 1.000000e+00 : f32
    %191 = vector.broadcast %cst_39 : f32 to vector<2x32xf32>
    %192 = arith.addf %191, %190 : vector<2x32xf32>
    %193 = arith.divf %191, %192 : vector<2x32xf32>
    %194 = vector.extract_strided_slice %181 {offsets = [0, 64], sizes = [2, 32], strides = [1, 1]} : vector<2x128xf32> to vector<2x32xf32>
    %195 = math.tanh %194 : vector<2x32xf32>
    %196 = vector.extract_strided_slice %181 {offsets = [0, 96], sizes = [2, 32], strides = [1, 1]} : vector<2x128xf32> to vector<2x32xf32>
    %197 = arith.negf %196 : vector<2x32xf32>
    %198 = math.exp %197 : vector<2x32xf32>
    %cst_40 = arith.constant 1.000000e+00 : f32
    %199 = vector.broadcast %cst_40 : f32 to vector<2x32xf32>
    %200 = arith.addf %199, %198 : vector<2x32xf32>
    %201 = arith.divf %199, %200 : vector<2x32xf32>
    %202 = arith.mulf %193, %176 : vector<2x32xf32>
    %203 = arith.mulf %187, %195 : vector<2x32xf32>
    %204 = arith.addf %202, %203 : vector<2x32xf32>
    %205 = math.tanh %204 : vector<2x32xf32>
    %206 = arith.mulf %201, %205 : vector<2x32xf32>
    %207 = vector.extract_strided_slice %8 {offsets = [14, 0], sizes = [2, 128], strides = [1, 1]} : vector<16x128xf32> to vector<2x128xf32>
    %cst_41 = arith.constant dense<0.000000e+00> : vector<2x128xf32>
    %208 = tpu.matmul %206, %4, %cst_41 {dimension_numbers = #tpu.dot_dimension_numbers<[1], [0], [0], [1], [0, 0, 1, 1], [], []>} : vector<2x32xf32>, vector<32x128xf32>, vector<2x128xf32> -> vector<2x128xf32>
    %209 = arith.addf %207, %208 : vector<2x128xf32>
    %210 = vector.extract_strided_slice %209 {offsets = [0, 0], sizes = [2, 32], strides = [1, 1]} : vector<2x128xf32> to vector<2x32xf32>
    %211 = arith.negf %210 : vector<2x32xf32>
    %212 = math.exp %211 : vector<2x32xf32>
    %cst_42 = arith.constant 1.000000e+00 : f32
    %213 = vector.broadcast %cst_42 : f32 to vector<2x32xf32>
    %214 = arith.addf %213, %212 : vector<2x32xf32>
    %215 = arith.divf %213, %214 : vector<2x32xf32>
    %216 = vector.extract_strided_slice %209 {offsets = [0, 32], sizes = [2, 32], strides = [1, 1]} : vector<2x128xf32> to vector<2x32xf32>
    %217 = arith.negf %216 : vector<2x32xf32>
    %218 = math.exp %217 : vector<2x32xf32>
    %cst_43 = arith.constant 1.000000e+00 : f32
    %219 = vector.broadcast %cst_43 : f32 to vector<2x32xf32>
    %220 = arith.addf %219, %218 : vector<2x32xf32>
    %221 = arith.divf %219, %220 : vector<2x32xf32>
    %222 = vector.extract_strided_slice %209 {offsets = [0, 64], sizes = [2, 32], strides = [1, 1]} : vector<2x128xf32> to vector<2x32xf32>
    %223 = math.tanh %222 : vector<2x32xf32>
    %224 = vector.extract_strided_slice %209 {offsets = [0, 96], sizes = [2, 32], strides = [1, 1]} : vector<2x128xf32> to vector<2x32xf32>
    %225 = arith.negf %224 : vector<2x32xf32>
    %226 = math.exp %225 : vector<2x32xf32>
    %cst_44 = arith.constant 1.000000e+00 : f32
    %227 = vector.broadcast %cst_44 : f32 to vector<2x32xf32>
    %228 = arith.addf %227, %226 : vector<2x32xf32>
    %229 = arith.divf %227, %228 : vector<2x32xf32>
    %230 = arith.mulf %221, %204 : vector<2x32xf32>
    %231 = arith.mulf %215, %223 : vector<2x32xf32>
    %232 = arith.addf %230, %231 : vector<2x32xf32>
    %233 = math.tanh %232 : vector<2x32xf32>
    %234 = arith.mulf %229, %233 : vector<2x32xf32>
    %c0_45 = arith.constant 0 : index
    %c0_46 = arith.constant 0 : index
    %235 = vector.load %arg6[%c0_45, %c0_46] : memref<1x32xf32, #tpu.memory_space<vmem>>, vector<1x32xf32>
    %c0_47 = arith.constant 0 : index
    %c0_48 = arith.constant 0 : index
    %236 = vector.load %arg7[%c0_47, %c0_48] : memref<1x32xf32, #tpu.memory_space<vmem>>, vector<1x32xf32>
    %c0_49 = arith.constant 0 : index
    %c0_50 = arith.constant 0 : index
    %237 = vector.load %arg16[%c0_49, %c0_50] : memref<16x32xf32, #tpu.memory_space<vmem>>, vector<2x32xf32>
    tpu.vector_store %arg16[%c0_49, %c0_50], %38 {strides = array<i32>} : memref<16x32xf32, #tpu.memory_space<vmem>>, vector<2x32xf32>,
    %c2 = arith.constant 2 : index
    %c0_51 = arith.constant 0 : index
    %238 = vector.load %arg16[%c2, %c0_51] : memref<16x32xf32, #tpu.memory_space<vmem>>, vector<2x32xf32>
    tpu.vector_store %arg16[%c2, %c0_51], %66 {strides = array<i32>} : memref<16x32xf32, #tpu.memory_space<vmem>>, vector<2x32xf32>,
    %c4 = arith.constant 4 : index
    %c0_52 = arith.constant 0 : index
    %239 = vector.load %arg16[%c4, %c0_52] : memref<16x32xf32, #tpu.memory_space<vmem>>, vector<2x32xf32>
    tpu.vector_store %arg16[%c4, %c0_52], %94 {strides = array<i32>} : memref<16x32xf32, #tpu.memory_space<vmem>>, vector<2x32xf32>,
    %c6 = arith.constant 6 : index
    %c0_53 = arith.constant 0 : index
    %240 = vector.load %arg16[%c6, %c0_53] : memref<16x32xf32, #tpu.memory_space<vmem>>, vector<2x32xf32>
    tpu.vector_store %arg16[%c6, %c0_53], %122 {strides = array<i32>} : memref<16x32xf32, #tpu.memory_space<vmem>>, vector<2x32xf32>,
    %c8 = arith.constant 8 : index
    %c0_54 = arith.constant 0 : index
    %241 = vector.load %arg16[%c8, %c0_54] : memref<16x32xf32, #tpu.memory_space<vmem>>, vector<2x32xf32>
    tpu.vector_store %arg16[%c8, %c0_54], %150 {strides = array<i32>} : memref<16x32xf32, #tpu.memory_space<vmem>>, vector<2x32xf32>,
    %c10 = arith.constant 10 : index
    %c0_55 = arith.constant 0 : index
    %242 = vector.load %arg16[%c10, %c0_55] : memref<16x32xf32, #tpu.memory_space<vmem>>, vector<2x32xf32>
    tpu.vector_store %arg16[%c10, %c0_55], %178 {strides = array<i32>} : memref<16x32xf32, #tpu.memory_space<vmem>>, vector<2x32xf32>,
    %c12 = arith.constant 12 : index
    %c0_56 = arith.constant 0 : index
    %243 = vector.load %arg16[%c12, %c0_56] : memref<16x32xf32, #tpu.memory_space<vmem>>, vector<2x32xf32>
    tpu.vector_store %arg16[%c12, %c0_56], %206 {strides = array<i32>} : memref<16x32xf32, #tpu.memory_space<vmem>>, vector<2x32xf32>,
    %c14 = arith.constant 14 : index
    %c0_57 = arith.constant 0 : index
    %244 = vector.load %arg16[%c14, %c0_57] : memref<16x32xf32, #tpu.memory_space<vmem>>, vector<2x32xf32>
    tpu.vector_store %arg16[%c14, %c0_57], %234 {strides = array<i32>} : memref<16x32xf32, #tpu.memory_space<vmem>>, vector<2x32xf32>,
    %c0_58 = arith.constant 0 : index
    %c0_59 = arith.constant 0 : index
    %245 = vector.load %arg16[%c0_58, %c0_59] : memref<16x32xf32, #tpu.memory_space<vmem>>, vector<16x32xf32>
    %246 = vector.broadcast %0 : vector<16x1xf32> to vector<16x32xf32>
    %247 = arith.mulf %245, %246 : vector<16x32xf32>
    %cst_60 = arith.constant dense<0.000000e+00> : vector<16xf32>
    %248 = vector.multi_reduction <add>, %247, %cst_60 [1] : vector<16x32xf32> to vector<16xf32>
    %249 = vector.shape_cast %248 : vector<16xf32> to vector<16x1xf32>
    %cst_61 = arith.constant 3.200000e+01 : f32
    %250 = vector.broadcast %cst_61 : f32 to vector<16x1xf32>
    %251 = arith.divf %249, %250 : vector<16x1xf32>
    %252 = vector.broadcast %251 : vector<16x1xf32> to vector<16x32xf32>
    %253 = arith.subf %247, %252 : vector<16x32xf32>
    %254 = arith.mulf %253, %253 : vector<16x32xf32>
    %cst_62 = arith.constant dense<0.000000e+00> : vector<16xf32>
    %255 = vector.multi_reduction <add>, %254, %cst_62 [1] : vector<16x32xf32> to vector<16xf32>
    %256 = vector.shape_cast %255 : vector<16xf32> to vector<16x1xf32>
    %cst_63 = arith.constant 3.200000e+01 : f32
    %257 = vector.broadcast %cst_63 : f32 to vector<16x1xf32>
    %258 = arith.divf %256, %257 : vector<16x1xf32>
    %259 = vector.broadcast %251 : vector<16x1xf32> to vector<16x32xf32>
    %260 = arith.subf %247, %259 : vector<16x32xf32>
    %cst_64 = arith.constant 9.99999974E-6 : f32
    %261 = vector.broadcast %cst_64 : f32 to vector<16x1xf32>
    %262 = arith.addf %258, %261 : vector<16x1xf32>
    %263 = math.rsqrt %262 : vector<16x1xf32>
    %264 = vector.broadcast %263 : vector<16x1xf32> to vector<16x32xf32>
    %265 = arith.mulf %260, %264 : vector<16x32xf32>
    %266 = vector.broadcast %235 : vector<1x32xf32> to vector<16x32xf32>
    %267 = arith.mulf %265, %266 : vector<16x32xf32>
    %268 = vector.broadcast %236 : vector<1x32xf32> to vector<16x32xf32>
    %269 = arith.addf %267, %268 : vector<16x32xf32>
    %c0_65 = arith.constant 0 : index
    %c0_66 = arith.constant 0 : index
    %270 = vector.load %arg8[%c0_65, %c0_66] : memref<32x128xf32, #tpu.memory_space<vmem>>, vector<32x128xf32>
    %c0_67 = arith.constant 0 : index
    %c0_68 = arith.constant 0 : index
    %271 = vector.load %arg9[%c0_67, %c0_68] : memref<32x128xf32, #tpu.memory_space<vmem>>, vector<32x128xf32>
    %c0_69 = arith.constant 0 : index
    %c0_70 = arith.constant 0 : index
    %272 = vector.load %arg10[%c0_69, %c0_70] : memref<1x128xf32, #tpu.memory_space<vmem>>, vector<1x128xf32>
    %cst_71 = arith.constant dense<0.000000e+00> : vector<16x128xf32>
    %273 = tpu.matmul %269, %270, %cst_71 {dimension_numbers = #tpu.dot_dimension_numbers<[1], [0], [0], [1], [0, 0, 1, 1], [], []>} : vector<16x32xf32>, vector<32x128xf32>, vector<16x128xf32> -> vector<16x128xf32>
    %274 = vector.broadcast %272 : vector<1x128xf32> to vector<16x128xf32>
    %275 = arith.addf %273, %274 : vector<16x128xf32>
    %cst_72 = arith.constant 0.000000e+00 : f32
    %276 = vector.broadcast %cst_72 : f32 to vector<2x32xf32>
    %cst_73 = arith.constant 0.000000e+00 : f32
    %277 = vector.broadcast %cst_73 : f32 to vector<2x32xf32>
    %278 = vector.extract_strided_slice %275 {offsets = [0, 0], sizes = [2, 128], strides = [1, 1]} : vector<16x128xf32> to vector<2x128xf32>
    %cst_74 = arith.constant dense<0.000000e+00> : vector<2x128xf32>
    %279 = tpu.matmul %276, %271, %cst_74 {dimension_numbers = #tpu.dot_dimension_numbers<[1], [0], [0], [1], [0, 0, 1, 1], [], []>} : vector<2x32xf32>, vector<32x128xf32>, vector<2x128xf32> -> vector<2x128xf32>
    %280 = arith.addf %278, %279 : vector<2x128xf32>
    %281 = vector.extract_strided_slice %280 {offsets = [0, 0], sizes = [2, 32], strides = [1, 1]} : vector<2x128xf32> to vector<2x32xf32>
    %282 = arith.negf %281 : vector<2x32xf32>
    %283 = math.exp %282 : vector<2x32xf32>
    %cst_75 = arith.constant 1.000000e+00 : f32
    %284 = vector.broadcast %cst_75 : f32 to vector<2x32xf32>
    %285 = arith.addf %284, %283 : vector<2x32xf32>
    %286 = arith.divf %284, %285 : vector<2x32xf32>
    %287 = vector.extract_strided_slice %280 {offsets = [0, 32], sizes = [2, 32], strides = [1, 1]} : vector<2x128xf32> to vector<2x32xf32>
    %288 = arith.negf %287 : vector<2x32xf32>
    %289 = math.exp %288 : vector<2x32xf32>
    %cst_76 = arith.constant 1.000000e+00 : f32
    %290 = vector.broadcast %cst_76 : f32 to vector<2x32xf32>
    %291 = arith.addf %290, %289 : vector<2x32xf32>
    %292 = arith.divf %290, %291 : vector<2x32xf32>
    %293 = vector.extract_strided_slice %280 {offsets = [0, 64], sizes = [2, 32], strides = [1, 1]} : vector<2x128xf32> to vector<2x32xf32>
    %294 = math.tanh %293 : vector<2x32xf32>
    %295 = vector.extract_strided_slice %280 {offsets = [0, 96], sizes = [2, 32], strides = [1, 1]} : vector<2x128xf32> to vector<2x32xf32>
    %296 = arith.negf %295 : vector<2x32xf32>
    %297 = math.exp %296 : vector<2x32xf32>
    %cst_77 = arith.constant 1.000000e+00 : f32
    %298 = vector.broadcast %cst_77 : f32 to vector<2x32xf32>
    %299 = arith.addf %298, %297 : vector<2x32xf32>
    %300 = arith.divf %298, %299 : vector<2x32xf32>
    %301 = arith.mulf %292, %277 : vector<2x32xf32>
    %302 = arith.mulf %286, %294 : vector<2x32xf32>
    %303 = arith.addf %301, %302 : vector<2x32xf32>
    %304 = math.tanh %303 : vector<2x32xf32>
    %305 = arith.mulf %300, %304 : vector<2x32xf32>
    %306 = vector.extract_strided_slice %275 {offsets = [2, 0], sizes = [2, 128], strides = [1, 1]} : vector<16x128xf32> to vector<2x128xf32>
    %cst_78 = arith.constant dense<0.000000e+00> : vector<2x128xf32>
    %307 = tpu.matmul %305, %271, %cst_78 {dimension_numbers = #tpu.dot_dimension_numbers<[1], [0], [0], [1], [0, 0, 1, 1], [], []>} : vector<2x32xf32>, vector<32x128xf32>, vector<2x128xf32> -> vector<2x128xf32>
    %308 = arith.addf %306, %307 : vector<2x128xf32>
    %309 = vector.extract_strided_slice %308 {offsets = [0, 0], sizes = [2, 32], strides = [1, 1]} : vector<2x128xf32> to vector<2x32xf32>
    %310 = arith.negf %309 : vector<2x32xf32>
    %311 = math.exp %310 : vector<2x32xf32>
    %cst_79 = arith.constant 1.000000e+00 : f32
    %312 = vector.broadcast %cst_79 : f32 to vector<2x32xf32>
    %313 = arith.addf %312, %311 : vector<2x32xf32>
    %314 = arith.divf %312, %313 : vector<2x32xf32>
    %315 = vector.extract_strided_slice %308 {offsets = [0, 32], sizes = [2, 32], strides = [1, 1]} : vector<2x128xf32> to vector<2x32xf32>
    %316 = arith.negf %315 : vector<2x32xf32>
    %317 = math.exp %316 : vector<2x32xf32>
    %cst_80 = arith.constant 1.000000e+00 : f32
    %318 = vector.broadcast %cst_80 : f32 to vector<2x32xf32>
    %319 = arith.addf %318, %317 : vector<2x32xf32>
    %320 = arith.divf %318, %319 : vector<2x32xf32>
    %321 = vector.extract_strided_slice %308 {offsets = [0, 64], sizes = [2, 32], strides = [1, 1]} : vector<2x128xf32> to vector<2x32xf32>
    %322 = math.tanh %321 : vector<2x32xf32>
    %323 = vector.extract_strided_slice %308 {offsets = [0, 96], sizes = [2, 32], strides = [1, 1]} : vector<2x128xf32> to vector<2x32xf32>
    %324 = arith.negf %323 : vector<2x32xf32>
    %325 = math.exp %324 : vector<2x32xf32>
    %cst_81 = arith.constant 1.000000e+00 : f32
    %326 = vector.broadcast %cst_81 : f32 to vector<2x32xf32>
    %327 = arith.addf %326, %325 : vector<2x32xf32>
    %328 = arith.divf %326, %327 : vector<2x32xf32>
    %329 = arith.mulf %320, %303 : vector<2x32xf32>
    %330 = arith.mulf %314, %322 : vector<2x32xf32>
    %331 = arith.addf %329, %330 : vector<2x32xf32>
    %332 = math.tanh %331 : vector<2x32xf32>
    %333 = arith.mulf %328, %332 : vector<2x32xf32>
    %334 = vector.extract_strided_slice %275 {offsets = [4, 0], sizes = [2, 128], strides = [1, 1]} : vector<16x128xf32> to vector<2x128xf32>
    %cst_82 = arith.constant dense<0.000000e+00> : vector<2x128xf32>
    %335 = tpu.matmul %333, %271, %cst_82 {dimension_numbers = #tpu.dot_dimension_numbers<[1], [0], [0], [1], [0, 0, 1, 1], [], []>} : vector<2x32xf32>, vector<32x128xf32>, vector<2x128xf32> -> vector<2x128xf32>
    %336 = arith.addf %334, %335 : vector<2x128xf32>
    %337 = vector.extract_strided_slice %336 {offsets = [0, 0], sizes = [2, 32], strides = [1, 1]} : vector<2x128xf32> to vector<2x32xf32>
    %338 = arith.negf %337 : vector<2x32xf32>
    %339 = math.exp %338 : vector<2x32xf32>
    %cst_83 = arith.constant 1.000000e+00 : f32
    %340 = vector.broadcast %cst_83 : f32 to vector<2x32xf32>
    %341 = arith.addf %340, %339 : vector<2x32xf32>
    %342 = arith.divf %340, %341 : vector<2x32xf32>
    %343 = vector.extract_strided_slice %336 {offsets = [0, 32], sizes = [2, 32], strides = [1, 1]} : vector<2x128xf32> to vector<2x32xf32>
    %344 = arith.negf %343 : vector<2x32xf32>
    %345 = math.exp %344 : vector<2x32xf32>
    %cst_84 = arith.constant 1.000000e+00 : f32
    %346 = vector.broadcast %cst_84 : f32 to vector<2x32xf32>
    %347 = arith.addf %346, %345 : vector<2x32xf32>
    %348 = arith.divf %346, %347 : vector<2x32xf32>
    %349 = vector.extract_strided_slice %336 {offsets = [0, 64], sizes = [2, 32], strides = [1, 1]} : vector<2x128xf32> to vector<2x32xf32>
    %350 = math.tanh %349 : vector<2x32xf32>
    %351 = vector.extract_strided_slice %336 {offsets = [0, 96], sizes = [2, 32], strides = [1, 1]} : vector<2x128xf32> to vector<2x32xf32>
    %352 = arith.negf %351 : vector<2x32xf32>
    %353 = math.exp %352 : vector<2x32xf32>
    %cst_85 = arith.constant 1.000000e+00 : f32
    %354 = vector.broadcast %cst_85 : f32 to vector<2x32xf32>
    %355 = arith.addf %354, %353 : vector<2x32xf32>
    %356 = arith.divf %354, %355 : vector<2x32xf32>
    %357 = arith.mulf %348, %331 : vector<2x32xf32>
    %358 = arith.mulf %342, %350 : vector<2x32xf32>
    %359 = arith.addf %357, %358 : vector<2x32xf32>
    %360 = math.tanh %359 : vector<2x32xf32>
    %361 = arith.mulf %356, %360 : vector<2x32xf32>
    %362 = vector.extract_strided_slice %275 {offsets = [6, 0], sizes = [2, 128], strides = [1, 1]} : vector<16x128xf32> to vector<2x128xf32>
    %cst_86 = arith.constant dense<0.000000e+00> : vector<2x128xf32>
    %363 = tpu.matmul %361, %271, %cst_86 {dimension_numbers = #tpu.dot_dimension_numbers<[1], [0], [0], [1], [0, 0, 1, 1], [], []>} : vector<2x32xf32>, vector<32x128xf32>, vector<2x128xf32> -> vector<2x128xf32>
    %364 = arith.addf %362, %363 : vector<2x128xf32>
    %365 = vector.extract_strided_slice %364 {offsets = [0, 0], sizes = [2, 32], strides = [1, 1]} : vector<2x128xf32> to vector<2x32xf32>
    %366 = arith.negf %365 : vector<2x32xf32>
    %367 = math.exp %366 : vector<2x32xf32>
    %cst_87 = arith.constant 1.000000e+00 : f32
    %368 = vector.broadcast %cst_87 : f32 to vector<2x32xf32>
    %369 = arith.addf %368, %367 : vector<2x32xf32>
    %370 = arith.divf %368, %369 : vector<2x32xf32>
    %371 = vector.extract_strided_slice %364 {offsets = [0, 32], sizes = [2, 32], strides = [1, 1]} : vector<2x128xf32> to vector<2x32xf32>
    %372 = arith.negf %371 : vector<2x32xf32>
    %373 = math.exp %372 : vector<2x32xf32>
    %cst_88 = arith.constant 1.000000e+00 : f32
    %374 = vector.broadcast %cst_88 : f32 to vector<2x32xf32>
    %375 = arith.addf %374, %373 : vector<2x32xf32>
    %376 = arith.divf %374, %375 : vector<2x32xf32>
    %377 = vector.extract_strided_slice %364 {offsets = [0, 64], sizes = [2, 32], strides = [1, 1]} : vector<2x128xf32> to vector<2x32xf32>
    %378 = math.tanh %377 : vector<2x32xf32>
    %379 = vector.extract_strided_slice %364 {offsets = [0, 96], sizes = [2, 32], strides = [1, 1]} : vector<2x128xf32> to vector<2x32xf32>
    %380 = arith.negf %379 : vector<2x32xf32>
    %381 = math.exp %380 : vector<2x32xf32>
    %cst_89 = arith.constant 1.000000e+00 : f32
    %382 = vector.broadcast %cst_89 : f32 to vector<2x32xf32>
    %383 = arith.addf %382, %381 : vector<2x32xf32>
    %384 = arith.divf %382, %383 : vector<2x32xf32>
    %385 = arith.mulf %376, %359 : vector<2x32xf32>
    %386 = arith.mulf %370, %378 : vector<2x32xf32>
    %387 = arith.addf %385, %386 : vector<2x32xf32>
    %388 = math.tanh %387 : vector<2x32xf32>
    %389 = arith.mulf %384, %388 : vector<2x32xf32>
    %390 = vector.extract_strided_slice %275 {offsets = [8, 0], sizes = [2, 128], strides = [1, 1]} : vector<16x128xf32> to vector<2x128xf32>
    %cst_90 = arith.constant dense<0.000000e+00> : vector<2x128xf32>
    %391 = tpu.matmul %389, %271, %cst_90 {dimension_numbers = #tpu.dot_dimension_numbers<[1], [0], [0], [1], [0, 0, 1, 1], [], []>} : vector<2x32xf32>, vector<32x128xf32>, vector<2x128xf32> -> vector<2x128xf32>
    %392 = arith.addf %390, %391 : vector<2x128xf32>
    %393 = vector.extract_strided_slice %392 {offsets = [0, 0], sizes = [2, 32], strides = [1, 1]} : vector<2x128xf32> to vector<2x32xf32>
    %394 = arith.negf %393 : vector<2x32xf32>
    %395 = math.exp %394 : vector<2x32xf32>
    %cst_91 = arith.constant 1.000000e+00 : f32
    %396 = vector.broadcast %cst_91 : f32 to vector<2x32xf32>
    %397 = arith.addf %396, %395 : vector<2x32xf32>
    %398 = arith.divf %396, %397 : vector<2x32xf32>
    %399 = vector.extract_strided_slice %392 {offsets = [0, 32], sizes = [2, 32], strides = [1, 1]} : vector<2x128xf32> to vector<2x32xf32>
    %400 = arith.negf %399 : vector<2x32xf32>
    %401 = math.exp %400 : vector<2x32xf32>
    %cst_92 = arith.constant 1.000000e+00 : f32
    %402 = vector.broadcast %cst_92 : f32 to vector<2x32xf32>
    %403 = arith.addf %402, %401 : vector<2x32xf32>
    %404 = arith.divf %402, %403 : vector<2x32xf32>
    %405 = vector.extract_strided_slice %392 {offsets = [0, 64], sizes = [2, 32], strides = [1, 1]} : vector<2x128xf32> to vector<2x32xf32>
    %406 = math.tanh %405 : vector<2x32xf32>
    %407 = vector.extract_strided_slice %392 {offsets = [0, 96], sizes = [2, 32], strides = [1, 1]} : vector<2x128xf32> to vector<2x32xf32>
    %408 = arith.negf %407 : vector<2x32xf32>
    %409 = math.exp %408 : vector<2x32xf32>
    %cst_93 = arith.constant 1.000000e+00 : f32
    %410 = vector.broadcast %cst_93 : f32 to vector<2x32xf32>
    %411 = arith.addf %410, %409 : vector<2x32xf32>
    %412 = arith.divf %410, %411 : vector<2x32xf32>
    %413 = arith.mulf %404, %387 : vector<2x32xf32>
    %414 = arith.mulf %398, %406 : vector<2x32xf32>
    %415 = arith.addf %413, %414 : vector<2x32xf32>
    %416 = math.tanh %415 : vector<2x32xf32>
    %417 = arith.mulf %412, %416 : vector<2x32xf32>
    %418 = vector.extract_strided_slice %275 {offsets = [10, 0], sizes = [2, 128], strides = [1, 1]} : vector<16x128xf32> to vector<2x128xf32>
    %cst_94 = arith.constant dense<0.000000e+00> : vector<2x128xf32>
    %419 = tpu.matmul %417, %271, %cst_94 {dimension_numbers = #tpu.dot_dimension_numbers<[1], [0], [0], [1], [0, 0, 1, 1], [], []>} : vector<2x32xf32>, vector<32x128xf32>, vector<2x128xf32> -> vector<2x128xf32>
    %420 = arith.addf %418, %419 : vector<2x128xf32>
    %421 = vector.extract_strided_slice %420 {offsets = [0, 0], sizes = [2, 32], strides = [1, 1]} : vector<2x128xf32> to vector<2x32xf32>
    %422 = arith.negf %421 : vector<2x32xf32>
    %423 = math.exp %422 : vector<2x32xf32>
    %cst_95 = arith.constant 1.000000e+00 : f32
    %424 = vector.broadcast %cst_95 : f32 to vector<2x32xf32>
    %425 = arith.addf %424, %423 : vector<2x32xf32>
    %426 = arith.divf %424, %425 : vector<2x32xf32>
    %427 = vector.extract_strided_slice %420 {offsets = [0, 32], sizes = [2, 32], strides = [1, 1]} : vector<2x128xf32> to vector<2x32xf32>
    %428 = arith.negf %427 : vector<2x32xf32>
    %429 = math.exp %428 : vector<2x32xf32>
    %cst_96 = arith.constant 1.000000e+00 : f32
    %430 = vector.broadcast %cst_96 : f32 to vector<2x32xf32>
    %431 = arith.addf %430, %429 : vector<2x32xf32>
    %432 = arith.divf %430, %431 : vector<2x32xf32>
    %433 = vector.extract_strided_slice %420 {offsets = [0, 64], sizes = [2, 32], strides = [1, 1]} : vector<2x128xf32> to vector<2x32xf32>
    %434 = math.tanh %433 : vector<2x32xf32>
    %435 = vector.extract_strided_slice %420 {offsets = [0, 96], sizes = [2, 32], strides = [1, 1]} : vector<2x128xf32> to vector<2x32xf32>
    %436 = arith.negf %435 : vector<2x32xf32>
    %437 = math.exp %436 : vector<2x32xf32>
    %cst_97 = arith.constant 1.000000e+00 : f32
    %438 = vector.broadcast %cst_97 : f32 to vector<2x32xf32>
    %439 = arith.addf %438, %437 : vector<2x32xf32>
    %440 = arith.divf %438, %439 : vector<2x32xf32>
    %441 = arith.mulf %432, %415 : vector<2x32xf32>
    %442 = arith.mulf %426, %434 : vector<2x32xf32>
    %443 = arith.addf %441, %442 : vector<2x32xf32>
    %444 = math.tanh %443 : vector<2x32xf32>
    %445 = arith.mulf %440, %444 : vector<2x32xf32>
    %446 = vector.extract_strided_slice %275 {offsets = [12, 0], sizes = [2, 128], strides = [1, 1]} : vector<16x128xf32> to vector<2x128xf32>
    %cst_98 = arith.constant dense<0.000000e+00> : vector<2x128xf32>
    %447 = tpu.matmul %445, %271, %cst_98 {dimension_numbers = #tpu.dot_dimension_numbers<[1], [0], [0], [1], [0, 0, 1, 1], [], []>} : vector<2x32xf32>, vector<32x128xf32>, vector<2x128xf32> -> vector<2x128xf32>
    %448 = arith.addf %446, %447 : vector<2x128xf32>
    %449 = vector.extract_strided_slice %448 {offsets = [0, 0], sizes = [2, 32], strides = [1, 1]} : vector<2x128xf32> to vector<2x32xf32>
    %450 = arith.negf %449 : vector<2x32xf32>
    %451 = math.exp %450 : vector<2x32xf32>
    %cst_99 = arith.constant 1.000000e+00 : f32
    %452 = vector.broadcast %cst_99 : f32 to vector<2x32xf32>
    %453 = arith.addf %452, %451 : vector<2x32xf32>
    %454 = arith.divf %452, %453 : vector<2x32xf32>
    %455 = vector.extract_strided_slice %448 {offsets = [0, 32], sizes = [2, 32], strides = [1, 1]} : vector<2x128xf32> to vector<2x32xf32>
    %456 = arith.negf %455 : vector<2x32xf32>
    %457 = math.exp %456 : vector<2x32xf32>
    %cst_100 = arith.constant 1.000000e+00 : f32
    %458 = vector.broadcast %cst_100 : f32 to vector<2x32xf32>
    %459 = arith.addf %458, %457 : vector<2x32xf32>
    %460 = arith.divf %458, %459 : vector<2x32xf32>
    %461 = vector.extract_strided_slice %448 {offsets = [0, 64], sizes = [2, 32], strides = [1, 1]} : vector<2x128xf32> to vector<2x32xf32>
    %462 = math.tanh %461 : vector<2x32xf32>
    %463 = vector.extract_strided_slice %448 {offsets = [0, 96], sizes = [2, 32], strides = [1, 1]} : vector<2x128xf32> to vector<2x32xf32>
    %464 = arith.negf %463 : vector<2x32xf32>
    %465 = math.exp %464 : vector<2x32xf32>
    %cst_101 = arith.constant 1.000000e+00 : f32
    %466 = vector.broadcast %cst_101 : f32 to vector<2x32xf32>
    %467 = arith.addf %466, %465 : vector<2x32xf32>
    %468 = arith.divf %466, %467 : vector<2x32xf32>
    %469 = arith.mulf %460, %443 : vector<2x32xf32>
    %470 = arith.mulf %454, %462 : vector<2x32xf32>
    %471 = arith.addf %469, %470 : vector<2x32xf32>
    %472 = math.tanh %471 : vector<2x32xf32>
    %473 = arith.mulf %468, %472 : vector<2x32xf32>
    %474 = vector.extract_strided_slice %275 {offsets = [14, 0], sizes = [2, 128], strides = [1, 1]} : vector<16x128xf32> to vector<2x128xf32>
    %cst_102 = arith.constant dense<0.000000e+00> : vector<2x128xf32>
    %475 = tpu.matmul %473, %271, %cst_102 {dimension_numbers = #tpu.dot_dimension_numbers<[1], [0], [0], [1], [0, 0, 1, 1], [], []>} : vector<2x32xf32>, vector<32x128xf32>, vector<2x128xf32> -> vector<2x128xf32>
    %476 = arith.addf %474, %475 : vector<2x128xf32>
    %477 = vector.extract_strided_slice %476 {offsets = [0, 0], sizes = [2, 32], strides = [1, 1]} : vector<2x128xf32> to vector<2x32xf32>
    %478 = arith.negf %477 : vector<2x32xf32>
    %479 = math.exp %478 : vector<2x32xf32>
    %cst_103 = arith.constant 1.000000e+00 : f32
    %480 = vector.broadcast %cst_103 : f32 to vector<2x32xf32>
    %481 = arith.addf %480, %479 : vector<2x32xf32>
    %482 = arith.divf %480, %481 : vector<2x32xf32>
    %483 = vector.extract_strided_slice %476 {offsets = [0, 32], sizes = [2, 32], strides = [1, 1]} : vector<2x128xf32> to vector<2x32xf32>
    %484 = arith.negf %483 : vector<2x32xf32>
    %485 = math.exp %484 : vector<2x32xf32>
    %cst_104 = arith.constant 1.000000e+00 : f32
    %486 = vector.broadcast %cst_104 : f32 to vector<2x32xf32>
    %487 = arith.addf %486, %485 : vector<2x32xf32>
    %488 = arith.divf %486, %487 : vector<2x32xf32>
    %489 = vector.extract_strided_slice %476 {offsets = [0, 64], sizes = [2, 32], strides = [1, 1]} : vector<2x128xf32> to vector<2x32xf32>
    %490 = math.tanh %489 : vector<2x32xf32>
    %491 = vector.extract_strided_slice %476 {offsets = [0, 96], sizes = [2, 32], strides = [1, 1]} : vector<2x128xf32> to vector<2x32xf32>
    %492 = arith.negf %491 : vector<2x32xf32>
    %493 = math.exp %492 : vector<2x32xf32>
    %cst_105 = arith.constant 1.000000e+00 : f32
    %494 = vector.broadcast %cst_105 : f32 to vector<2x32xf32>
    %495 = arith.addf %494, %493 : vector<2x32xf32>
    %496 = arith.divf %494, %495 : vector<2x32xf32>
    %497 = arith.mulf %488, %471 : vector<2x32xf32>
    %498 = arith.mulf %482, %490 : vector<2x32xf32>
    %499 = arith.addf %497, %498 : vector<2x32xf32>
    %500 = math.tanh %499 : vector<2x32xf32>
    %501 = arith.mulf %496, %500 : vector<2x32xf32>
    %cst_106 = arith.constant 0.000000e+00 : f32
    %502 = vector.broadcast %cst_106 : f32 to vector<2x32xf32>
    %c0_i32 = arith.constant 0 : i32
    %503 = vector.broadcast %c0_i32 : i32 to vector<2x1xi32>
    %504 = arith.cmpi eq, %1, %503 : vector<2x1xi32>
    %505 = vector.shape_cast %504 : vector<2x1xi1> to vector<2x1xi1>
    %506 = vector.broadcast %505 : vector<2x1xi1> to vector<2x32xi1>
    %507 = arith.select %506, %305, %502 : vector<2x32xi1>, vector<2x32xf32>
    %c1_i32 = arith.constant 1 : i32
    %508 = vector.broadcast %c1_i32 : i32 to vector<2x1xi32>
    %509 = arith.cmpi eq, %1, %508 : vector<2x1xi32>
    %510 = vector.shape_cast %509 : vector<2x1xi1> to vector<2x1xi1>
    %511 = vector.broadcast %510 : vector<2x1xi1> to vector<2x32xi1>
    %512 = arith.select %511, %333, %507 : vector<2x32xi1>, vector<2x32xf32>
    %c2_i32 = arith.constant 2 : i32
    %513 = vector.broadcast %c2_i32 : i32 to vector<2x1xi32>
    %514 = arith.cmpi eq, %1, %513 : vector<2x1xi32>
    %515 = vector.shape_cast %514 : vector<2x1xi1> to vector<2x1xi1>
    %516 = vector.broadcast %515 : vector<2x1xi1> to vector<2x32xi1>
    %517 = arith.select %516, %361, %512 : vector<2x32xi1>, vector<2x32xf32>
    %c3_i32 = arith.constant 3 : i32
    %518 = vector.broadcast %c3_i32 : i32 to vector<2x1xi32>
    %519 = arith.cmpi eq, %1, %518 : vector<2x1xi32>
    %520 = vector.shape_cast %519 : vector<2x1xi1> to vector<2x1xi1>
    %521 = vector.broadcast %520 : vector<2x1xi1> to vector<2x32xi1>
    %522 = arith.select %521, %389, %517 : vector<2x32xi1>, vector<2x32xf32>
    %c4_i32 = arith.constant 4 : i32
    %523 = vector.broadcast %c4_i32 : i32 to vector<2x1xi32>
    %524 = arith.cmpi eq, %1, %523 : vector<2x1xi32>
    %525 = vector.shape_cast %524 : vector<2x1xi1> to vector<2x1xi1>
    %526 = vector.broadcast %525 : vector<2x1xi1> to vector<2x32xi1>
    %527 = arith.select %526, %417, %522 : vector<2x32xi1>, vector<2x32xf32>
    %c5_i32 = arith.constant 5 : i32
    %528 = vector.broadcast %c5_i32 : i32 to vector<2x1xi32>
    %529 = arith.cmpi eq, %1, %528 : vector<2x1xi32>
    %530 = vector.shape_cast %529 : vector<2x1xi1> to vector<2x1xi1>
    %531 = vector.broadcast %530 : vector<2x1xi1> to vector<2x32xi1>
    %532 = arith.select %531, %445, %527 : vector<2x32xi1>, vector<2x32xf32>
    %c6_i32 = arith.constant 6 : i32
    %533 = vector.broadcast %c6_i32 : i32 to vector<2x1xi32>
    %534 = arith.cmpi eq, %1, %533 : vector<2x1xi32>
    %535 = vector.shape_cast %534 : vector<2x1xi1> to vector<2x1xi1>
    %536 = vector.broadcast %535 : vector<2x1xi1> to vector<2x32xi1>
    %537 = arith.select %536, %473, %532 : vector<2x32xi1>, vector<2x32xf32>
    %c7_i32 = arith.constant 7 : i32
    %538 = vector.broadcast %c7_i32 : i32 to vector<2x1xi32>
    %539 = arith.cmpi eq, %1, %538 : vector<2x1xi32>
    %540 = vector.shape_cast %539 : vector<2x1xi1> to vector<2x1xi1>
    %541 = vector.broadcast %540 : vector<2x1xi1> to vector<2x32xi1>
    %542 = arith.select %541, %501, %537 : vector<2x32xi1>, vector<2x32xf32>
    %c0_107 = arith.constant 0 : index
    %c0_108 = arith.constant 0 : index
    %543 = vector.load %arg11[%c0_107, %c0_108] : memref<32x128xf32, #tpu.memory_space<vmem>>, vector<32x128xf32>
    %cst_109 = arith.constant dense<0.000000e+00> : vector<2x128xf32>
    %544 = tpu.matmul %542, %543, %cst_109 {dimension_numbers = #tpu.dot_dimension_numbers<[1], [0], [0], [1], [0, 0, 1, 1], [], []>} : vector<2x32xf32>, vector<32x128xf32>, vector<2x128xf32> -> vector<2x128xf32>
    %c0_110 = arith.constant 0 : index
    %c0_111 = arith.constant 0 : index
    %545 = vector.load %arg12[%c0_110, %c0_111] : memref<1x128xf32, #tpu.memory_space<vmem>>, vector<1x128xf32>
    %546 = vector.broadcast %545 : vector<1x128xf32> to vector<2x128xf32>
    %547 = arith.addf %544, %546 : vector<2x128xf32>
    %cst_112 = arith.constant 0.000000e+00 : f32
    %548 = vector.broadcast %cst_112 : f32 to vector<2x128xf32>
    %549 = arith.maximumf %547, %548 : vector<2x128xf32>
    %c0_113 = arith.constant 0 : index
    %c0_114 = arith.constant 0 : index
    %550 = vector.load %arg13[%c0_113, %c0_114] : memref<128x2xf32, #tpu.memory_space<vmem>>, vector<128x2xf32>
    %cst_115 = arith.constant dense<0.000000e+00> : vector<2x2xf32>
    %551 = tpu.matmul %549, %550, %cst_115 {dimension_numbers = #tpu.dot_dimension_numbers<[1], [0], [0], [1], [0, 0, 1, 1], [], []>} : vector<2x128xf32>, vector<128x2xf32>, vector<2x2xf32> -> vector<2x2xf32>
    %c0_116 = arith.constant 0 : index
    %c0_117 = arith.constant 0 : index
    %552 = vector.load %arg14[%c0_116, %c0_117] : memref<1x2xf32, #tpu.memory_space<vmem>>, vector<1x2xf32>
    %553 = vector.broadcast %552 : vector<1x2xf32> to vector<2x2xf32>
    %554 = arith.addf %551, %553 : vector<2x2xf32>
    %cst_118 = arith.constant dense<0xFF800000> : vector<2xf32>
    %555 = vector.multi_reduction <maximumf>, %554, %cst_118 [1] : vector<2x2xf32> to vector<2xf32>
    %556 = vector.shape_cast %555 : vector<2xf32> to vector<2x1xf32>
    %557 = vector.broadcast %556 : vector<2x1xf32> to vector<2x2xf32>
    %558 = arith.subf %554, %557 : vector<2x2xf32>
    %559 = math.exp %558 : vector<2x2xf32>
    %cst_119 = arith.constant dense<0.000000e+00> : vector<2xf32>
    %560 = vector.multi_reduction <add>, %559, %cst_119 [1] : vector<2x2xf32> to vector<2xf32>
    %561 = vector.shape_cast %560 : vector<2xf32> to vector<2x1xf32>
    %562 = math.log %561 : vector<2x1xf32>
    %563 = vector.broadcast %562 : vector<2x1xf32> to vector<2x2xf32>
    %564 = arith.subf %558, %563 : vector<2x2xf32>
    %c0_120 = arith.constant 0 : index
    %c0_121 = arith.constant 0 : index
    %565 = vector.load %arg15[%c0_120, %c0_121] : memref<2x2xf32, #tpu.memory_space<vmem>>, vector<2x2xf32>
    tpu.vector_store %arg15[%c0_120, %c0_121], %564 {strides = array<i32>} : memref<2x2xf32, #tpu.memory_space<vmem>>, vector<2x2xf32>,
    return
  }
}

</mosaic_0001>

<llo_original>
// kernel: sst2_forward.1
$region0: #{sst2_forward.1}
  #allocation0 [shape = 'u32[]', space=smem, size = 0x4, offset = 0x4, fixed_abs, tag = 'smem constant byte address 0x4 - core index']
  #allocation1 [shape = 'u32[72,128]{1,0:T(1,128)}', space=vmem, size = 0x9000, scoped, tag = 'internal scratch']
  #allocation2 [shape = 'f32[16,32]{1,0:T(8,128)}', space=vmem, size = 0x2000, scoped, tag = 'scratch operand']
  %s0 = inlined_call_operand.vmem [shape: f32[16,32], index: 0, kind: input, shape index: {}]
  %s1 = inlined_call_operand.vmem [shape: f32[16,1], index: 1, kind: input, shape index: {}]
  %s2 = inlined_call_operand.vmem [shape: s32[2,1], index: 2, kind: input, shape index: {}]
  %s3 = inlined_call_operand.vmem [shape: f32[32,128], index: 3, kind: input, shape index: {}]
  %s4 = inlined_call_operand.vmem [shape: f32[32,128], index: 4, kind: input, shape index: {}]
  %s5 = inlined_call_operand.vmem [shape: f32[1,128], index: 5, kind: input, shape index: {}]
  %s6 = inlined_call_operand.vmem [shape: f32[1,32], index: 6, kind: input, shape index: {}]
  %s7 = inlined_call_operand.vmem [shape: f32[1,32], index: 7, kind: input, shape index: {}]
  %s8 = inlined_call_operand.vmem [shape: f32[32,128], index: 8, kind: input, shape index: {}]
  %s9 = inlined_call_operand.vmem [shape: f32[32,128], index: 9, kind: input, shape index: {}]
  %s10 = inlined_call_operand.vmem [shape: f32[1,128], index: 10, kind: input, shape index: {}]
  %s11 = inlined_call_operand.vmem [shape: f32[32,128], index: 11, kind: input, shape index: {}]
  %s12 = inlined_call_operand.vmem [shape: f32[1,128], index: 12, kind: input, shape index: {}]
  %s13 = inlined_call_operand.vmem [shape: f32[128,2], index: 13, kind: input, shape index: {}]
  %s14 = inlined_call_operand.vmem [shape: f32[1,2], index: 14, kind: input, shape index: {}]
  %s15 = inlined_call_operand.hbm [shape: f32[2,2], index: 15, kind: output, shape index: {}]
  %s16 = sld [smem:[#allocation0]]
  $region70: #{sst2_forward.1} parent=0
    _
  %s18 = ssub.s32 1, %s16
  %s19 = scalar_select 0, %s18, %s16
  $region1: #{sst2_forward.1} parent=0
    #allocation3 [shape = 'u8[1024]{0}', space=vmem, size = 0x400, scoped, tag = 'output window, operand 0, single buffered']
    #allocation4 [shape = 's32[1]{0}', space=sflag, size = 0x4, scoped, tag = 'scoped memory for sst2_forward.1']
    %20 = vsyncpa [#allocation4], 0
    // Predicated region
    $region2: #{sst2_forward.1} parent=1 // pred_check
      _
    $region3: #{sst2_forward.1} parent=1 // pred_check_branch
      %22 = sbr.rel (0) target = $region5
    $region4: #{sst2_forward.1} parent=1 // pred_region
      _
    $region5: #{sst2_forward.1} parent=1 // pred_fallthru
      _
    // Predicated region
    $region6: #{sst2_forward.1} parent=1 // pred_check
      _
    $region7: #{sst2_forward.1} parent=1 // pred_check_branch
      %24 = sbr.rel (0) target = $region9
    $region8: #{sst2_forward.1} parent=1 // pred_region
      _
    $region9: #{sst2_forward.1} parent=1 // pred_fallthru
      _
    // Predicated region
    $region10: #{sst2_forward.1} parent=1 // pred_check
      _
    $region11: #{sst2_forward.1} parent=1 // pred_check_branch
      %26 = sbr.rel (0) target = $region13
    $region12: #{sst2_forward.1} parent=1 // pred_region
      _
    $region13: #{sst2_forward.1} parent=1 // pred_fallthru
      _
    // Predicated region
    $region14: #{sst2_forward.1} parent=1 // pred_check
      _
    $region15: #{sst2_forward.1} parent=1 // pred_check_branch
      %28 = sbr.rel (0) target = $region17
    $region16: #{sst2_forward.1} parent=1 // pred_region
      _
    $region17: #{sst2_forward.1} parent=1 // pred_fallthru
      _
    // Predicated region
    $region18: #{sst2_forward.1} parent=1 // pred_check
      _
    $region19: #{sst2_forward.1} parent=1 // pred_check_branch
      %30 = sbr.rel (0) target = $region21
    $region20: #{sst2_forward.1} parent=1 // pred_region
      _
    $region21: #{sst2_forward.1} parent=1 // pred_fallthru
      _
    // Predicated region
    $region22: #{sst2_forward.1} parent=1 // pred_check
      _
    $region23: #{sst2_forward.1} parent=1 // pred_check_branch
      %32 = sbr.rel (0) target = $region25
    $region24: #{sst2_forward.1} parent=1 // pred_region
      _
    $region25: #{sst2_forward.1} parent=1 // pred_fallthru
      _
    // Predicated region
    $region26: #{sst2_forward.1} parent=1 // pred_check
      _
    $region27: #{sst2_forward.1} parent=1 // pred_check_branch
      %34 = sbr.rel (0) target = $region29
    $region28: #{sst2_forward.1} parent=1 // pred_region
      _
    $region29: #{sst2_forward.1} parent=1 // pred_fallthru
      _
    // Predicated region
    $region30: #{sst2_forward.1} parent=1 // pred_check
      _
    $region31: #{sst2_forward.1} parent=1 // pred_check_branch
      %36 = sbr.rel (0) target = $region33
    $region32: #{sst2_forward.1} parent=1 // pred_region
      _
    $region33: #{sst2_forward.1} parent=1 // pred_fallthru
      _
    // Predicated region
    $region34: #{sst2_forward.1} parent=1 // pred_check
      _
    $region35: #{sst2_forward.1} parent=1 // pred_check_branch
      %38 = sbr.rel (0) target = $region37
    $region36: #{sst2_forward.1} parent=1 // pred_region
      _
    $region37: #{sst2_forward.1} parent=1 // pred_fallthru
      _
    // Predicated region
    $region38: #{sst2_forward.1} parent=1 // pred_check
      _
    $region39: #{sst2_forward.1} parent=1 // pred_check_branch
      %40 = sbr.rel (0) target = $region41
    $region40: #{sst2_forward.1} parent=1 // pred_region
      _
    $region41: #{sst2_forward.1} parent=1 // pred_fallthru
      _
    // Predicated region
    $region42: #{sst2_forward.1} parent=1 // pred_check
      _
    $region43: #{sst2_forward.1} parent=1 // pred_check_branch
      %42 = sbr.rel (0) target = $region45
    $region44: #{sst2_forward.1} parent=1 // pred_region
      _
    $region45: #{sst2_forward.1} parent=1 // pred_fallthru
      _
    // Predicated region
    $region46: #{sst2_forward.1} parent=1 // pred_check
      _
    $region47: #{sst2_forward.1} parent=1 // pred_check_branch
      %44 = sbr.rel (0) target = $region49
    $region48: #{sst2_forward.1} parent=1 // pred_region
      _
    $region49: #{sst2_forward.1} parent=1 // pred_fallthru
      _
    // Predicated region
    $region50: #{sst2_forward.1} parent=1 // pred_check
      _
    $region51: #{sst2_forward.1} parent=1 // pred_check_branch
      %46 = sbr.rel (0) target = $region53
    $region52: #{sst2_forward.1} parent=1 // pred_region
      _
    $region53: #{sst2_forward.1} parent=1 // pred_fallthru
      _
    // Predicated region
    $region54: #{sst2_forward.1} parent=1 // pred_check
      _
    $region55: #{sst2_forward.1} parent=1 // pred_check_branch
      %48 = sbr.rel (0) target = $region57
    $region56: #{sst2_forward.1} parent=1 // pred_region
      _
    $region57: #{sst2_forward.1} parent=1 // pred_fallthru
      _
    // Predicated region
    $region58: #{sst2_forward.1} parent=1 // pred_check
      _
    $region59: #{sst2_forward.1} parent=1 // pred_check_branch
      %50 = sbr.rel (0) target = $region61
    $region60: #{sst2_forward.1} parent=1 // pred_region
      _
    $region61: #{sst2_forward.1} parent=1 // pred_fallthru
      _
    %v51 = vld [vmem:[%s1] sm:$0xff]
    %v52 = vld [vmem:[%s1 + $0x8] sm:$0xff]
    %v53 = vld [vmem:[%s2] sm:$0x3]
    %v54 = vld [vmem:[%s0] sm:$0xff]
    %v55 = vld [vmem:[%s0 + $0x8] sm:$0xff]
    %v56 = vld [vmem:[%s3] sm:$0xff]
    %v57 = vld [vmem:[%s3 + $0x8] sm:$0xff]
    %v58 = vld [vmem:[%s3 + $0x10] sm:$0xff]
    %v59 = vld [vmem:[%s3 + $0x18] sm:$0xff]
    %v60 = vld [vmem:[%s4] sm:$0xff]
    %v61 = vld [vmem:[%s4 + $0x8] sm:$0xff]
    %v62 = vld [vmem:[%s4 + $0x10] sm:$0xff]
    %v63 = vld [vmem:[%s4 + $0x18] sm:$0xff]
    %v64 = vld [vmem:[%s5] sm:$0x1]
    %v66 = vperm.slane %v64, 0
    %vm68 = vcmask 261120
    %v70 = vsel %vm68, %v54, 0
    %v73 = vsel %vm68, %v55, 0
    %75 = vmatpush.msra.mxu0 0.0
    %76 = vmatpush.msra.mxu0 0.0
    %77 = vmatpush.msra.mxu0 0.0
    %78 = vmatpush.msra.mxu0 0.0
    %79 = vmatpush.msra.mxu0 0.0
    %80 = vmatpush.msra.mxu0 0.0
    %81 = vmatpush.msra.mxu0 0.0
    %82 = vmatpush.msra.mxu0 0.0
    %83 = vmatpush.msra.mxu0 0.0
    %84 = vmatpush.msra.mxu0 0.0
    %85 = vmatpush.msra.mxu0 0.0
    %86 = vmatpush.msra.mxu0 0.0
    %87 = vmatpush.msra.mxu0 %v59
    %88 = vmatpush.msra.mxu0 %v58
    %89 = vmatpush.msra.mxu0 %v57
    %90 = vmatpush.msra.mxu0 %v56
    %91 = vmatmul.f32.gmra.mxu0 %v70
    %v92 = vpop.f32.mrf.mxu0
    %v93 = vadd.f32 %v66, %v92
    %94 = vmatmul.f32.gmra.mxu0 %v73
    %v95 = vpop.f32.mrf.mxu0
    %v96 = vadd.f32 %v66, %v95
    %97 = vdwg.mxu0
    %v99 = vsel %vm68, 0.0, 0
    %101 = vmatpush.msra.mxu0 0.0
    %102 = vmatpush.msra.mxu0 0.0
    %103 = vmatpush.msra.mxu0 0.0
    %104 = vmatpush.msra.mxu0 0.0
    %105 = vmatpush.msra.mxu0 0.0
    %106 = vmatpush.msra.mxu0 0.0
    %107 = vmatpush.msra.mxu0 0.0
    %108 = vmatpush.msra.mxu0 0.0
    %109 = vmatpush.msra.mxu0 0.0
    %110 = vmatpush.msra.mxu0 0.0
    %111 = vmatpush.msra.mxu0 0.0
    %112 = vmatpush.msra.mxu0 0.0
    %113 = vmatpush.msra.mxu0 %v63
    %114 = vmatpush.msra.mxu0 %v62
    %115 = vmatpush.msra.mxu0 %v61
    %116 = vmatpush.msra.mxu0 %v60
    %117 = vmatmul.f32.gmra.mxu0 %v99
    %v118 = vpop.f32.mrf.mxu0
    %v119 = vadd.f32 0.0, %v118
    %120 = vdwg.mxu0
    %v121 = vadd.f32 %v93, %v119
    %v122 = vxor.u32 %v121, 2147483648
    %v123 = vmul.f32 %v122, 1.442695
    %v124 = vpow.pop %v123
    %v125 = vadd.f32 %v124, 1.0
    %v126 = vrcp.pop %v125
    %v127 = vmul.f32 %v125, %v126
    %v128 = vsub.f32 1.0, %v127
    %v129 = vmul.f32 %v126, %v128
    %v130 = vadd.f32 %v126, %v129
    %vm131 = vweird.f32 %v125
    %vm132 = vweird.f32 %v126
    %vm133 = vmor %vm131, %vm132
    %v134 = vsel %vm133, %v126, %v130
    %v135 = vand.u32 2147483647, %v125
    %vm136 = vcmp.eq.f32.partialorder %v135, 8.507059e+37
    %v137 = vand.u32 %v125, 2147483648
    %v138 = vor.u32 1.1754944e-38, %v137
    %v139 = vsel %vm136, %v138, %v134
    %v140 = vmul.f32 1.0, %v139
    %v141 = vtanh.pop %v121
    %v142 = vmul.f32 %v140, 0.0
    %144 = vrot.lane.b32.xlu0 %v141, 64
    %v145 = vpop.permute.xlu0 %144
    %v147 = vmul.f32 %v140, %v145
    %149 = vrot.lane.b32.xlu0 %v147, 32
    %v150 = vpop.permute.xlu0 %149
    %v152 = vadd.f32 %v142, %v150
    %v153 = vtanh.pop %v152
    %155 = vrot.lane.b32.xlu0 %v153, 64
    %v156 = vpop.permute.xlu0 %155
    %v158 = vmul.f32 %v140, %v156
    %160 = vrot.lane.b32.xlu0 %v158, 32
    %v161 = vpop.permute.xlu0 %160
    %v162 = vsel %vm68, %v161, 0
    %164 = vmatpush.msra.mxu0 0.0
    %165 = vmatpush.msra.mxu0 0.0
    %166 = vmatpush.msra.mxu0 0.0
    %167 = vmatpush.msra.mxu0 0.0
    %168 = vmatpush.msra.mxu0 0.0
    %169 = vmatpush.msra.mxu0 0.0
    %170 = vmatpush.msra.mxu0 0.0
    %171 = vmatpush.msra.mxu0 0.0
    %172 = vmatpush.msra.mxu0 0.0
    %173 = vmatpush.msra.mxu0 0.0
    %174 = vmatpush.msra.mxu0 0.0
    %175 = vmatpush.msra.mxu0 0.0
    %176 = vmatpush.msra.mxu0 %v63
    %177 = vmatpush.msra.mxu0 %v62
    %178 = vmatpush.msra.mxu0 %v61
    %179 = vmatpush.msra.mxu0 %v60
    %180 = vmatmul.f32.gmra.mxu0 %v162
    %v181 = vpop.f32.mrf.mxu0
    %v182 = vadd.f32 0.0, %v181
    %183 = vdwg.mxu0
    %v185 = vrot.slane %v182, 6
    %v187 = vadd.f32 %v93, %v185
    %v188 = vxor.u32 %v187, 2147483648
    %v189 = vmul.f32 %v188, 1.442695
    %v190 = vpow.pop %v189
    %v191 = vadd.f32 %v190, 1.0
    %v192 = vrcp.pop %v191
    %v193 = vmul.f32 %v191, %v192
    %v194 = vsub.f32 1.0, %v193
    %v195 = vmul.f32 %v192, %v194
    %v196 = vadd.f32 %v192, %v195
    %vm197 = vweird.f32 %v191
    %vm198 = vweird.f32 %v192
    %vm199 = vmor %vm197, %vm198
    %v200 = vsel %vm199, %v192, %v196
    %v201 = vand.u32 2147483647, %v191
    %vm202 = vcmp.eq.f32.partialorder %v201, 8.507059e+37
    %v203 = vand.u32 %v191, 2147483648
    %v204 = vor.u32 1.1754944e-38, %v203
    %v205 = vsel %vm202, %v204, %v200
    %v206 = vmul.f32 1.0, %v205
    %v207 = vtanh.pop %v187
    %v209 = vrot.slane %v152, 6
    %v211 = vmul.f32 %v206, %v209
    %213 = vrot.lane.b32.xlu0 %v207, 64
    %v214 = vpop.permute.xlu0 %213
    %v216 = vmul.f32 %v206, %v214
    %218 = vrot.lane.b32.xlu0 %v216, 32
    %v219 = vpop.permute.xlu0 %218
    %v221 = vadd.f32 %v211, %v219
    %v222 = vtanh.pop %v221
    %224 = vrot.lane.b32.xlu0 %v222, 64
    %v225 = vpop.permute.xlu0 %224
    %v227 = vmul.f32 %v206, %v225
    %v229 = vrot.slane %v227, 2
    %230 = vrot.lane.b32.xlu0 %v229, 32
    %v231 = vpop.permute.xlu0 %230
    %v232 = vsel %vm68, %v231, 0
    %234 = vmatpush.msra.mxu0 0.0
    %235 = vmatpush.msra.mxu0 0.0
    %236 = vmatpush.msra.mxu0 0.0
    %237 = vmatpush.msra.mxu0 0.0
    %238 = vmatpush.msra.mxu0 0.0
    %239 = vmatpush.msra.mxu0 0.0
    %240 = vmatpush.msra.mxu0 0.0
    %241 = vmatpush.msra.mxu0 0.0
    %242 = vmatpush.msra.mxu0 0.0
    %243 = vmatpush.msra.mxu0 0.0
    %244 = vmatpush.msra.mxu0 0.0
    %245 = vmatpush.msra.mxu0 0.0
    %246 = vmatpush.msra.mxu0 %v63
    %247 = vmatpush.msra.mxu0 %v62
    %248 = vmatpush.msra.mxu0 %v61
    %249 = vmatpush.msra.mxu0 %v60
    %250 = vmatmul.f32.gmra.mxu0 %v232
    %v251 = vpop.f32.mrf.mxu0
    %v252 = vadd.f32 0.0, %v251
    %253 = vdwg.mxu0
    %v255 = vrot.slane %v252, 4
    %v257 = vadd.f32 %v93, %v255
    %v258 = vxor.u32 %v257, 2147483648
    %v259 = vmul.f32 %v258, 1.442695
    %v260 = vpow.pop %v259
    %v261 = vadd.f32 %v260, 1.0
    %v262 = vrcp.pop %v261
    %v263 = vmul.f32 %v261, %v262
    %v264 = vsub.f32 1.0, %v263
    %v265 = vmul.f32 %v262, %v264
    %v266 = vadd.f32 %v262, %v265
    %vm267 = vweird.f32 %v261
    %vm268 = vweird.f32 %v262
    %vm269 = vmor %vm267, %vm268
    %v270 = vsel %vm269, %v262, %v266
    %v271 = vand.u32 2147483647, %v261
    %vm272 = vcmp.eq.f32.partialorder %v271, 8.507059e+37
    %v273 = vand.u32 %v261, 2147483648
    %v274 = vor.u32 1.1754944e-38, %v273
    %v275 = vsel %vm272, %v274, %v270
    %v276 = vmul.f32 1.0, %v275
    %v277 = vtanh.pop %v257
    %v279 = vrot.slane %v221, 6
    %v281 = vmul.f32 %v276, %v279
    %283 = vrot.lane.b32.xlu0 %v277, 64
    %v284 = vpop.permute.xlu0 %283
    %v286 = vmul.f32 %v276, %v284
    %288 = vrot.lane.b32.xlu0 %v286, 32
    %v289 = vpop.permute.xlu0 %288
    %v291 = vadd.f32 %v281, %v289
    %v292 = vtanh.pop %v291
    %294 = vrot.lane.b32.xlu0 %v292, 64
    %v295 = vpop.permute.xlu0 %294
    %v297 = vmul.f32 %v276, %v295
    %v299 = vrot.slane %v297, 4
    %300 = vrot.lane.b32.xlu0 %v299, 32
    %v301 = vpop.permute.xlu0 %300
    %v302 = vsel %vm68, %v301, 0
    %304 = vmatpush.msra.mxu0 0.0
    %305 = vmatpush.msra.mxu0 0.0
    %306 = vmatpush.msra.mxu0 0.0
    %307 = vmatpush.msra.mxu0 0.0
    %308 = vmatpush.msra.mxu0 0.0
    %309 = vmatpush.msra.mxu0 0.0
    %310 = vmatpush.msra.mxu0 0.0
    %311 = vmatpush.msra.mxu0 0.0
    %312 = vmatpush.msra.mxu0 0.0
    %313 = vmatpush.msra.mxu0 0.0
    %314 = vmatpush.msra.mxu0 0.0
    %315 = vmatpush.msra.mxu0 0.0
    %316 = vmatpush.msra.mxu0 %v63
    %317 = vmatpush.msra.mxu0 %v62
    %318 = vmatpush.msra.mxu0 %v61
    %319 = vmatpush.msra.mxu0 %v60
    %320 = vmatmul.f32.gmra.mxu0 %v302
    %v321 = vpop.f32.mrf.mxu0
    %v322 = vadd.f32 0.0, %v321
    %323 = vdwg.mxu0
    %v325 = vrot.slane %v322, 2
    %v327 = vadd.f32 %v93, %v325
    %v328 = vxor.u32 %v327, 2147483648
    %v329 = vmul.f32 %v328, 1.442695
    %v330 = vpow.pop %v329
    %v331 = vadd.f32 %v330, 1.0
    %v332 = vrcp.pop %v331
    %v333 = vmul.f32 %v331, %v332
    %v334 = vsub.f32 1.0, %v333
    %v335 = vmul.f32 %v332, %v334
    %v336 = vadd.f32 %v332, %v335
    %vm337 = vweird.f32 %v331
    %vm338 = vweird.f32 %v332
    %vm339 = vmor %vm337, %vm338
    %v340 = vsel %vm339, %v332, %v336
    %v341 = vand.u32 2147483647, %v331
    %vm342 = vcmp.eq.f32.partialorder %v341, 8.507059e+37
    %v343 = vand.u32 %v331, 2147483648
    %v344 = vor.u32 1.1754944e-38, %v343
    %v345 = vsel %vm342, %v344, %v340
    %v346 = vmul.f32 1.0, %v345
    %v347 = vtanh.pop %v327
    %v349 = vrot.slane %v291, 6
    %v351 = vmul.f32 %v346, %v349
    %353 = vrot.lane.b32.xlu0 %v347, 64
    %v354 = vpop.permute.xlu0 %353
    %v356 = vmul.f32 %v346, %v354
    %358 = vrot.lane.b32.xlu0 %v356, 32
    %v359 = vpop.permute.xlu0 %358
    %v361 = vadd.f32 %v351, %v359
    %v362 = vtanh.pop %v361
    %364 = vrot.lane.b32.xlu0 %v362, 64
    %v365 = vpop.permute.xlu0 %364
    %v367 = vmul.f32 %v346, %v365
    %v369 = vrot.slane %v367, 6
    %370 = vrot.lane.b32.xlu0 %v369, 32
    %v371 = vpop.permute.xlu0 %370
    %v372 = vsel %vm68, %v371, 0
    %374 = vmatpush.msra.mxu0 0.0
    %375 = vmatpush.msra.mxu0 0.0
    %376 = vmatpush.msra.mxu0 0.0
    %377 = vmatpush.msra.mxu0 0.0
    %378 = vmatpush.msra.mxu0 0.0
    %379 = vmatpush.msra.mxu0 0.0
    %380 = vmatpush.msra.mxu0 0.0
    %381 = vmatpush.msra.mxu0 0.0
    %382 = vmatpush.msra.mxu0 0.0
    %383 = vmatpush.msra.mxu0 0.0
    %384 = vmatpush.msra.mxu0 0.0
    %385 = vmatpush.msra.mxu0 0.0
    %386 = vmatpush.msra.mxu0 %v63
    %387 = vmatpush.msra.mxu0 %v62
    %388 = vmatpush.msra.mxu0 %v61
    %389 = vmatpush.msra.mxu0 %v60
    %390 = vmatmul.f32.gmra.mxu0 %v372
    %v391 = vpop.f32.mrf.mxu0
    %v392 = vadd.f32 0.0, %v391
    %393 = vdwg.mxu0
    %v394 = vadd.f32 %v96, %v392
    %v395 = vxor.u32 %v394, 2147483648
    %v396 = vmul.f32 %v395, 1.442695
    %v397 = vpow.pop %v396
    %v398 = vadd.f32 %v397, 1.0
    %v399 = vrcp.pop %v398
    %v400 = vmul.f32 %v398, %v399
    %v401 = vsub.f32 1.0, %v400
    %v402 = vmul.f32 %v399, %v401
    %v403 = vadd.f32 %v399, %v402
    %vm404 = vweird.f32 %v398
    %vm405 = vweird.f32 %v399
    %vm406 = vmor %vm404, %vm405
    %v407 = vsel %vm406, %v399, %v403
    %v408 = vand.u32 2147483647, %v398
    %vm409 = vcmp.eq.f32.partialorder %v408, 8.507059e+37
    %v410 = vand.u32 %v398, 2147483648
    %v411 = vor.u32 1.1754944e-38, %v410
    %v412 = vsel %vm409, %v411, %v407
    %v413 = vmul.f32 1.0, %v412
    %v414 = vtanh.pop %v394
    %v416 = vrot.slane %v361, 6
    %v418 = vmul.f32 %v413, %v416
    %420 = vrot.lane.b32.xlu0 %v414, 64
    %v421 = vpop.permute.xlu0 %420
    %v423 = vmul.f32 %v413, %v421
    %425 = vrot.lane.b32.xlu0 %v423, 32
    %v426 = vpop.permute.xlu0 %425
    %v428 = vadd.f32 %v418, %v426
    %v429 = vtanh.pop %v428
    %431 = vrot.lane.b32.xlu0 %v429, 64
    %v432 = vpop.permute.xlu0 %431
    %v434 = vmul.f32 %v413, %v432
    %436 = vrot.lane.b32.xlu0 %v434, 32
    %v437 = vpop.permute.xlu0 %436
    %v438 = vsel %vm68, %v437, 0
    %440 = vmatpush.msra.mxu0 0.0
    %441 = vmatpush.msra.mxu0 0.0
    %442 = vmatpush.msra.mxu0 0.0
    %443 = vmatpush.msra.mxu0 0.0
    %444 = vmatpush.msra.mxu0 0.0
    %445 = vmatpush.msra.mxu0 0.0
    %446 = vmatpush.msra.mxu0 0.0
    %447 = vmatpush.msra.mxu0 0.0
    %448 = vmatpush.msra.mxu0 0.0
    %449 = vmatpush.msra.mxu0 0.0
    %450 = vmatpush.msra.mxu0 0.0
    %451 = vmatpush.msra.mxu0 0.0
    %452 = vmatpush.msra.mxu0 %v63
    %453 = vmatpush.msra.mxu0 %v62
    %454 = vmatpush.msra.mxu0 %v61
    %455 = vmatpush.msra.mxu0 %v60
    %456 = vmatmul.f32.gmra.mxu0 %v438
    %v457 = vpop.f32.mrf.mxu0
    %v458 = vadd.f32 0.0, %v457
    %459 = vdwg.mxu0
    %v461 = vrot.slane %v458, 6
    %v463 = vadd.f32 %v96, %v461
    %v464 = vxor.u32 %v463, 2147483648
    %v465 = vmul.f32 %v464, 1.442695
    %v466 = vpow.pop %v465
    %v467 = vadd.f32 %v466, 1.0
    %v468 = vrcp.pop %v467
    %v469 = vmul.f32 %v467, %v468
    %v470 = vsub.f32 1.0, %v469
    %v471 = vmul.f32 %v468, %v470
    %v472 = vadd.f32 %v468, %v471
    %vm473 = vweird.f32 %v467
    %vm474 = vweird.f32 %v468
    %vm475 = vmor %vm473, %vm474
    %v476 = vsel %vm475, %v468, %v472
    %v477 = vand.u32 2147483647, %v467
    %vm478 = vcmp.eq.f32.partialorder %v477, 8.507059e+37
    %v479 = vand.u32 %v467, 2147483648
    %v480 = vor.u32 1.1754944e-38, %v479
    %v481 = vsel %vm478, %v480, %v476
    %v482 = vmul.f32 1.0, %v481
    %v483 = vtanh.pop %v463
    %v485 = vrot.slane %v428, 6
    %v487 = vmul.f32 %v482, %v485
    %489 = vrot.lane.b32.xlu0 %v483, 64
    %v490 = vpop.permute.xlu0 %489
    %v492 = vmul.f32 %v482, %v490
    %494 = vrot.lane.b32.xlu0 %v492, 32
    %v495 = vpop.permute.xlu0 %494
    %v497 = vadd.f32 %v487, %v495
    %v498 = vtanh.pop %v497
    %500 = vrot.lane.b32.xlu0 %v498, 64
    %v501 = vpop.permute.xlu0 %500
    %v503 = vmul.f32 %v482, %v501
    %v505 = vrot.slane %v503, 2
    %506 = vrot.lane.b32.xlu0 %v505, 32
    %v507 = vpop.permute.xlu0 %506
    %v508 = vsel %vm68, %v507, 0
    %510 = vmatpush.msra.mxu0 0.0
    %511 = vmatpush.msra.mxu0 0.0
    %512 = vmatpush.msra.mxu0 0.0
    %513 = vmatpush.msra.mxu0 0.0
    %514 = vmatpush.msra.mxu0 0.0
    %515 = vmatpush.msra.mxu0 0.0
    %516 = vmatpush.msra.mxu0 0.0
    %517 = vmatpush.msra.mxu0 0.0
    %518 = vmatpush.msra.mxu0 0.0
    %519 = vmatpush.msra.mxu0 0.0
    %520 = vmatpush.msra.mxu0 0.0
    %521 = vmatpush.msra.mxu0 0.0
    %522 = vmatpush.msra.mxu0 %v63
    %523 = vmatpush.msra.mxu0 %v62
    %524 = vmatpush.msra.mxu0 %v61
    %525 = vmatpush.msra.mxu0 %v60
    %526 = vmatmul.f32.gmra.mxu0 %v508
    %v527 = vpop.f32.mrf.mxu0
    %v528 = vadd.f32 0.0, %v527
    %529 = vdwg.mxu0
    %v531 = vrot.slane %v528, 4
    %v533 = vadd.f32 %v96, %v531
    %v534 = vxor.u32 %v533, 2147483648
    %v535 = vmul.f32 %v534, 1.442695
    %v536 = vpow.pop %v535
    %v537 = vadd.f32 %v536, 1.0
    %v538 = vrcp.pop %v537
    %v539 = vmul.f32 %v537, %v538
    %v540 = vsub.f32 1.0, %v539
    %v541 = vmul.f32 %v538, %v540
    %v542 = vadd.f32 %v538, %v541
    %vm543 = vweird.f32 %v537
    %vm544 = vweird.f32 %v538
    %vm545 = vmor %vm543, %vm544
    %v546 = vsel %vm545, %v538, %v542
    %v547 = vand.u32 2147483647, %v537
    %vm548 = vcmp.eq.f32.partialorder %v547, 8.507059e+37
    %v549 = vand.u32 %v537, 2147483648
    %v550 = vor.u32 1.1754944e-38, %v549
    %v551 = vsel %vm548, %v550, %v546
    %v552 = vmul.f32 1.0, %v551
    %v553 = vtanh.pop %v533
    %v555 = vrot.slane %v497, 6
    %v557 = vmul.f32 %v552, %v555
    %559 = vrot.lane.b32.xlu0 %v553, 64
    %v560 = vpop.permute.xlu0 %559
    %v562 = vmul.f32 %v552, %v560
    %564 = vrot.lane.b32.xlu0 %v562, 32
    %v565 = vpop.permute.xlu0 %564
    %v567 = vadd.f32 %v557, %v565
    %v568 = vtanh.pop %v567
    %570 = vrot.lane.b32.xlu0 %v568, 64
    %v571 = vpop.permute.xlu0 %570
    %v573 = vmul.f32 %v552, %v571
    %v575 = vrot.slane %v573, 4
    %576 = vrot.lane.b32.xlu0 %v575, 32
    %v577 = vpop.permute.xlu0 %576
    %v578 = vsel %vm68, %v577, 0
    %580 = vmatpush.msra.mxu0 0.0
    %581 = vmatpush.msra.mxu0 0.0
    %582 = vmatpush.msra.mxu0 0.0
    %583 = vmatpush.msra.mxu0 0.0
    %584 = vmatpush.msra.mxu0 0.0
    %585 = vmatpush.msra.mxu0 0.0
    %586 = vmatpush.msra.mxu0 0.0
    %587 = vmatpush.msra.mxu0 0.0
    %588 = vmatpush.msra.mxu0 0.0
    %589 = vmatpush.msra.mxu0 0.0
    %590 = vmatpush.msra.mxu0 0.0
    %591 = vmatpush.msra.mxu0 0.0
    %592 = vmatpush.msra.mxu0 %v63
    %593 = vmatpush.msra.mxu0 %v62
    %594 = vmatpush.msra.mxu0 %v61
    %595 = vmatpush.msra.mxu0 %v60
    %596 = vmatmul.f32.gmra.mxu0 %v578
    %v597 = vpop.f32.mrf.mxu0
    %v598 = vadd.f32 0.0, %v597
    %599 = vdwg.mxu0
    %v601 = vrot.slane %v598, 2
    %v603 = vadd.f32 %v96, %v601
    %v604 = vxor.u32 %v603, 2147483648
    %v605 = vmul.f32 %v604, 1.442695
    %v606 = vpow.pop %v605
    %v607 = vadd.f32 %v606, 1.0
    %v608 = vrcp.pop %v607
    %v609 = vmul.f32 %v607, %v608
    %v610 = vsub.f32 1.0, %v609
    %v611 = vmul.f32 %v608, %v610
    %v612 = vadd.f32 %v608, %v611
    %vm613 = vweird.f32 %v607
    %vm614 = vweird.f32 %v608
    %vm615 = vmor %vm613, %vm614
    %v616 = vsel %vm615, %v608, %v612
    %v617 = vand.u32 2147483647, %v607
    %vm618 = vcmp.eq.f32.partialorder %v617, 8.507059e+37
    %v619 = vand.u32 %v607, 2147483648
    %v620 = vor.u32 1.1754944e-38, %v619
    %v621 = vsel %vm618, %v620, %v616
    %v622 = vmul.f32 1.0, %v621
    %v623 = vtanh.pop %v603
    %v625 = vrot.slane %v567, 6
    %v627 = vmul.f32 %v622, %v625
    %629 = vrot.lane.b32.xlu0 %v623, 64
    %v630 = vpop.permute.xlu0 %629
    %v632 = vmul.f32 %v622, %v630
    %634 = vrot.lane.b32.xlu0 %v632, 32
    %v635 = vpop.permute.xlu0 %634
    %v637 = vadd.f32 %v627, %v635
    %v638 = vtanh.pop %v637
    %640 = vrot.lane.b32.xlu0 %v638, 64
    %v641 = vpop.permute.xlu0 %640
    %v643 = vmul.f32 %v622, %v641
    %v644 = vld [vmem:[%s6] sm:$0x1]
    %v645 = vld [vmem:[%s7] sm:$0x1]
    %vm647 = vcmask 254976
    %648 = vst.msk [vmem:[#allocation2] sm:$0x3] %vm647, %v161
    %649 = vrot.lane.b32.xlu0 %v227, 32
    %v650 = vpop.permute.xlu0 %649
    %vm652 = vcmask 257026
    %653 = vst.msk [vmem:[#allocation2] sm:$0xc] %vm652, %v650
    %654 = vrot.lane.b32.xlu0 %v297, 32
    %v655 = vpop.permute.xlu0 %654
    %vm657 = vcmask 259076
    %658 = vst.msk [vmem:[#allocation2] sm:$0x30] %vm657, %v655
    %659 = vrot.lane.b32.xlu0 %v367, 32
    %v660 = vpop.permute.xlu0 %659
    %vm662 = vcmask 261126
    %663 = vst.msk [vmem:[#allocation2] sm:$0xc0] %vm662, %v660
    %665 = vst.msk [vmem:[#allocation2 + $0x8] sm:$0x3] %vm647, %v437
    %666 = vrot.lane.b32.xlu0 %v503, 32
    %v667 = vpop.permute.xlu0 %666
    %669 = vst.msk [vmem:[#allocation2 + $0x8] sm:$0xc] %vm652, %v667
    %670 = vrot.lane.b32.xlu0 %v573, 32
    %v671 = vpop.permute.xlu0 %670
    %673 = vst.msk [vmem:[#allocation2 + $0x8] sm:$0x30] %vm657, %v671
    %675 = vrot.lane.b32.xlu0 %v643, 32
    %v676 = vpop.permute.xlu0 %675
    %678 = vst.msk [vmem:[#allocation2 + $0x8] sm:$0xc0] %vm662, %v676
    %v679 = vld [vmem:[#allocation2] sm:$0xff]
    %v680 = vld [vmem:[#allocation2 + $0x8] sm:$0xff]
    %682 = vset.pattern.permute.xlu0 0
    %683 = vperm.xlu0 %682, %v51
    %v684 = vpop.permute.xlu0 %683
    %687 = vset.pattern.permute.xlu0 0
    %688 = vperm.xlu0 %687, %v52
    %v689 = vpop.permute.xlu0 %688
    %v691 = vmul.f32 %v679, %v684
    %v692 = vmul.f32 %v680, %v689
    %v693 = vsel %vm68, %v691, 0.0
    %694 = vadd.xlane.f32.xlu0 %v693
    %v695 = vpop.xlane.xlu0 %694
    %v696 = vsel %vm68, %v692, 0.0
    %697 = vadd.xlane.f32.xlu0 %v696
    %v698 = vpop.xlane.xlu0 %697
    %v699 = vrcp.pop 32.0
    %v700 = vmul.f32 32.0, %v699
    %v701 = vsub.f32 1.0, %v700
    %v702 = vmul.f32 %v699, %v701
    %v703 = vadd.f32 %v699, %v702
    %vm704 = vweird.f32 %v699
    %v705 = vsel %vm704, %v699, %v703
    %v706 = vmul.f32 %v695, %v705
    %v707 = vmul.f32 %v698, %v705
    %v708 = vsub.f32 %v691, %v706
    %v709 = vsub.f32 %v692, %v707
    %v710 = vmul.f32 %v708, %v708
    %v711 = vmul.f32 %v709, %v709
    %v712 = vsel %vm68, %v710, 0.0
    %713 = vadd.xlane.f32.xlu0 %v712
    %v714 = vpop.xlane.xlu0 %713
    %v715 = vsel %vm68, %v711, 0.0
    %716 = vadd.xlane.f32.xlu0 %v715
    %v717 = vpop.xlane.xlu0 %716
    %v718 = vmul.f32 %v714, %v705
    %v719 = vmul.f32 %v717, %v705
    %v720 = vadd.f32 %v718, 1e-05
    %v721 = vadd.f32 %v719, 1e-05
    %v722 = vrsqrt.pop %v720
    %v723 = vmul.f32 %v722, %v720
    %v724 = vmul.f32 %v723, %v722
    %v725 = vmul.f32 0.5, %v724
    %v726 = vsub.f32 1.5, %v725
    %v727 = vmul.f32 %v722, %v726
    %vm728 = vweird.f32 %v720
    %vm729 = vweird.f32 %v722
    %vm730 = vmor %vm728, %vm729
    %v731 = vsel %vm730, %v722, %v727
    %v732 = vrsqrt.pop %v721
    %v733 = vmul.f32 %v732, %v721
    %v734 = vmul.f32 %v733, %v732
    %v735 = vmul.f32 0.5, %v734
    %v736 = vsub.f32 1.5, %v735
    %v737 = vmul.f32 %v732, %v736
    %vm738 = vweird.f32 %v721
    %vm739 = vweird.f32 %v732
    %vm740 = vmor %vm738, %vm739
    %v741 = vsel %vm740, %v732, %v737
    %v742 = vmul.f32 %v708, %v731
    %v743 = vmul.f32 %v709, %v741
    %v745 = vperm.slane %v644, 0
    %v747 = vmul.f32 %v742, %v745
    %v748 = vmul.f32 %v743, %v745
    %v750 = vperm.slane %v645, 0
    %v752 = vadd.f32 %v747, %v750
    %v753 = vadd.f32 %v748, %v750
    %v754 = vld [vmem:[%s8] sm:$0xff]
    %v755 = vld [vmem:[%s8 + $0x8] sm:$0xff]
    %v756 = vld [vmem:[%s8 + $0x10] sm:$0xff]
    %v757 = vld [vmem:[%s8 + $0x18] sm:$0xff]
    %v758 = vld [vmem:[%s9] sm:$0xff]
    %v759 = vld [vmem:[%s9 + $0x8] sm:$0xff]
    %v760 = vld [vmem:[%s9 + $0x10] sm:$0xff]
    %v761 = vld [vmem:[%s9 + $0x18] sm:$0xff]
    %v762 = vld [vmem:[%s10] sm:$0x1]
    %v764 = vperm.slane %v762, 0
    %v767 = vsel %vm68, %v752, 0
    %v770 = vsel %vm68, %v753, 0
    %772 = vmatpush.msra.mxu0 0.0
    %773 = vmatpush.msra.mxu0 0.0
    %774 = vmatpush.msra.mxu0 0.0
    %775 = vmatpush.msra.mxu0 0.0
    %776 = vmatpush.msra.mxu0 0.0
    %777 = vmatpush.msra.mxu0 0.0
    %778 = vmatpush.msra.mxu0 0.0
    %779 = vmatpush.msra.mxu0 0.0
    %780 = vmatpush.msra.mxu0 0.0
    %781 = vmatpush.msra.mxu0 0.0
    %782 = vmatpush.msra.mxu0 0.0
    %783 = vmatpush.msra.mxu0 0.0
    %784 = vmatpush.msra.mxu0 %v757
    %785 = vmatpush.msra.mxu0 %v756
    %786 = vmatpush.msra.mxu0 %v755
    %787 = vmatpush.msra.mxu0 %v754
    %788 = vmatmul.f32.gmra.mxu0 %v767
    %v789 = vpop.f32.mrf.mxu0
    %v790 = vadd.f32 %v764, %v789
    %791 = vmatmul.f32.gmra.mxu0 %v770
    %v792 = vpop.f32.mrf.mxu0
    %v793 = vadd.f32 %v764, %v792
    %794 = vdwg.mxu0
    %795 = vmatpush.msra.mxu0 0.0
    %796 = vmatpush.msra.mxu0 0.0
    %797 = vmatpush.msra.mxu0 0.0
    %798 = vmatpush.msra.mxu0 0.0
    %799 = vmatpush.msra.mxu0 0.0
    %800 = vmatpush.msra.mxu0 0.0
    %801 = vmatpush.msra.mxu0 0.0
    %802 = vmatpush.msra.mxu0 0.0
    %803 = vmatpush.msra.mxu0 0.0
    %804 = vmatpush.msra.mxu0 0.0
    %805 = vmatpush.msra.mxu0 0.0
    %806 = vmatpush.msra.mxu0 0.0
    %807 = vmatpush.msra.mxu0 %v761
    %808 = vmatpush.msra.mxu0 %v760
    %809 = vmatpush.msra.mxu0 %v759
    %810 = vmatpush.msra.mxu0 %v758
    %811 = vmatmul.f32.gmra.mxu0 %v99
    %v812 = vpop.f32.mrf.mxu0
    %v813 = vadd.f32 0.0, %v812
    %814 = vdwg.mxu0
    %v815 = vadd.f32 %v790, %v813
    %v816 = vxor.u32 %v815, 2147483648
    %v817 = vmul.f32 %v816, 1.442695
    %v818 = vpow.pop %v817
    %v819 = vadd.f32 %v818, 1.0
    %v820 = vrcp.pop %v819
    %v821 = vmul.f32 %v819, %v820
    %v822 = vsub.f32 1.0, %v821
    %v823 = vmul.f32 %v820, %v822
    %v824 = vadd.f32 %v820, %v823
    %vm825 = vweird.f32 %v819
    %vm826 = vweird.f32 %v820
    %vm827 = vmor %vm825, %vm826
    %v828 = vsel %vm827, %v820, %v824
    %v829 = vand.u32 2147483647, %v819
    %vm830 = vcmp.eq.f32.partialorder %v829, 8.507059e+37
    %v831 = vand.u32 %v819, 2147483648
    %v832 = vor.u32 1.1754944e-38, %v831
    %v833 = vsel %vm830, %v832, %v828
    %v834 = vmul.f32 1.0, %v833
    %v835 = vtanh.pop %v815
    %v836 = vmul.f32 %v834, 0.0
    %838 = vrot.lane.b32.xlu0 %v835, 64
    %v839 = vpop.permute.xlu0 %838
    %v841 = vmul.f32 %v834, %v839
    %843 = vrot.lane.b32.xlu0 %v841, 32
    %v844 = vpop.permute.xlu0 %843
    %v846 = vadd.f32 %v836, %v844
    %v847 = vtanh.pop %v846
    %849 = vrot.lane.b32.xlu0 %v847, 64
    %v850 = vpop.permute.xlu0 %849
    %v852 = vmul.f32 %v834, %v850
    %854 = vrot.lane.b32.xlu0 %v852, 32
    %v855 = vpop.permute.xlu0 %854
    %v856 = vsel %vm68, %v855, 0
    %858 = vmatpush.msra.mxu0 0.0
    %859 = vmatpush.msra.mxu0 0.0
    %860 = vmatpush.msra.mxu0 0.0
    %861 = vmatpush.msra.mxu0 0.0
    %862 = vmatpush.msra.mxu0 0.0
    %863 = vmatpush.msra.mxu0 0.0
    %864 = vmatpush.msra.mxu0 0.0
    %865 = vmatpush.msra.mxu0 0.0
    %866 = vmatpush.msra.mxu0 0.0
    %867 = vmatpush.msra.mxu0 0.0
    %868 = vmatpush.msra.mxu0 0.0
    %869 = vmatpush.msra.mxu0 0.0
    %870 = vmatpush.msra.mxu0 %v761
    %871 = vmatpush.msra.mxu0 %v760
    %872 = vmatpush.msra.mxu0 %v759
    %873 = vmatpush.msra.mxu0 %v758
    %874 = vmatmul.f32.gmra.mxu0 %v856
    %v875 = vpop.f32.mrf.mxu0
    %v876 = vadd.f32 0.0, %v875
    %877 = vdwg.mxu0
    %v879 = vrot.slane %v876, 6
    %v881 = vadd.f32 %v790, %v879
    %v882 = vxor.u32 %v881, 2147483648
    %v883 = vmul.f32 %v882, 1.442695
    %v884 = vpow.pop %v883
    %v885 = vadd.f32 %v884, 1.0
    %v886 = vrcp.pop %v885
    %v887 = vmul.f32 %v885, %v886
    %v888 = vsub.f32 1.0, %v887
    %v889 = vmul.f32 %v886, %v888
    %v890 = vadd.f32 %v886, %v889
    %vm891 = vweird.f32 %v885
    %vm892 = vweird.f32 %v886
    %vm893 = vmor %vm891, %vm892
    %v894 = vsel %vm893, %v886, %v890
    %v895 = vand.u32 2147483647, %v885
    %vm896 = vcmp.eq.f32.partialorder %v895, 8.507059e+37
    %v897 = vand.u32 %v885, 2147483648
    %v898 = vor.u32 1.1754944e-38, %v897
    %v899 = vsel %vm896, %v898, %v894
    %v900 = vmul.f32 1.0, %v899
    %v901 = vtanh.pop %v881
    %v903 = vrot.slane %v846, 6
    %v905 = vmul.f32 %v900, %v903
    %907 = vrot.lane.b32.xlu0 %v901, 64
    %v908 = vpop.permute.xlu0 %907
    %v910 = vmul.f32 %v900, %v908
    %912 = vrot.lane.b32.xlu0 %v910, 32
    %v913 = vpop.permute.xlu0 %912
    %v915 = vadd.f32 %v905, %v913
    %v916 = vtanh.pop %v915
    %918 = vrot.lane.b32.xlu0 %v916, 64
    %v919 = vpop.permute.xlu0 %918
    %v921 = vmul.f32 %v900, %v919
    %v923 = vrot.slane %v921, 2
    %924 = vrot.lane.b32.xlu0 %v923, 32
    %v925 = vpop.permute.xlu0 %924
    %v926 = vsel %vm68, %v925, 0
    %928 = vmatpush.msra.mxu0 0.0
    %929 = vmatpush.msra.mxu0 0.0
    %930 = vmatpush.msra.mxu0 0.0
    %931 = vmatpush.msra.mxu0 0.0
    %932 = vmatpush.msra.mxu0 0.0
    %933 = vmatpush.msra.mxu0 0.0
    %934 = vmatpush.msra.mxu0 0.0
    %935 = vmatpush.msra.mxu0 0.0
    %936 = vmatpush.msra.mxu0 0.0
    %937 = vmatpush.msra.mxu0 0.0
    %938 = vmatpush.msra.mxu0 0.0
    %939 = vmatpush.msra.mxu0 0.0
    %940 = vmatpush.msra.mxu0 %v761
    %941 = vmatpush.msra.mxu0 %v760
    %942 = vmatpush.msra.mxu0 %v759
    %943 = vmatpush.msra.mxu0 %v758
    %944 = vmatmul.f32.gmra.mxu0 %v926
    %v945 = vpop.f32.mrf.mxu0
    %v946 = vadd.f32 0.0, %v945
    %947 = vdwg.mxu0
    %v949 = vrot.slane %v946, 4
    %v951 = vadd.f32 %v790, %v949
    %v952 = vxor.u32 %v951, 2147483648
    %v953 = vmul.f32 %v952, 1.442695
    %v954 = vpow.pop %v953
    %v955 = vadd.f32 %v954, 1.0
    %v956 = vrcp.pop %v955
    %v957 = vmul.f32 %v955, %v956
    %v958 = vsub.f32 1.0, %v957
    %v959 = vmul.f32 %v956, %v958
    %v960 = vadd.f32 %v956, %v959
    %vm961 = vweird.f32 %v955
    %vm962 = vweird.f32 %v956
    %vm963 = vmor %vm961, %vm962
    %v964 = vsel %vm963, %v956, %v960
    %v965 = vand.u32 2147483647, %v955
    %vm966 = vcmp.eq.f32.partialorder %v965, 8.507059e+37
    %v967 = vand.u32 %v955, 2147483648
    %v968 = vor.u32 1.1754944e-38, %v967
    %v969 = vsel %vm966, %v968, %v964
    %v970 = vmul.f32 1.0, %v969
    %v971 = vtanh.pop %v951
    %v973 = vrot.slane %v915, 6
    %v975 = vmul.f32 %v970, %v973
    %977 = vrot.lane.b32.xlu0 %v971, 64
    %v978 = vpop.permute.xlu0 %977
    %v980 = vmul.f32 %v970, %v978
    %982 = vrot.lane.b32.xlu0 %v980, 32
    %v983 = vpop.permute.xlu0 %982
    %v985 = vadd.f32 %v975, %v983
    %v986 = vtanh.pop %v985
    %988 = vrot.lane.b32.xlu0 %v986, 64
    %v989 = vpop.permute.xlu0 %988
    %v991 = vmul.f32 %v970, %v989
    %v993 = vrot.slane %v991, 4
    %994 = vrot.lane.b32.xlu0 %v993, 32
    %v995 = vpop.permute.xlu0 %994
    %v996 = vsel %vm68, %v995, 0
    %998 = vmatpush.msra.mxu0 0.0
    %999 = vmatpush.msra.mxu0 0.0
    %1000 = vmatpush.msra.mxu0 0.0
    %1001 = vmatpush.msra.mxu0 0.0
    %1002 = vmatpush.msra.mxu0 0.0
    %1003 = vmatpush.msra.mxu0 0.0
    %1004 = vmatpush.msra.mxu0 0.0
    %1005 = vmatpush.msra.mxu0 0.0
    %1006 = vmatpush.msra.mxu0 0.0
    %1007 = vmatpush.msra.mxu0 0.0
    %1008 = vmatpush.msra.mxu0 0.0
    %1009 = vmatpush.msra.mxu0 0.0
    %1010 = vmatpush.msra.mxu0 %v761
    %1011 = vmatpush.msra.mxu0 %v760
    %1012 = vmatpush.msra.mxu0 %v759
    %1013 = vmatpush.msra.mxu0 %v758
    %1014 = vmatmul.f32.gmra.mxu0 %v996
    %v1015 = vpop.f32.mrf.mxu0
    %v1016 = vadd.f32 0.0, %v1015
    %1017 = vdwg.mxu0
    %v1019 = vrot.slane %v1016, 2
    %v1021 = vadd.f32 %v790, %v1019
    %v1022 = vxor.u32 %v1021, 2147483648
    %v1023 = vmul.f32 %v1022, 1.442695
    %v1024 = vpow.pop %v1023
    %v1025 = vadd.f32 %v1024, 1.0
    %v1026 = vrcp.pop %v1025
    %v1027 = vmul.f32 %v1025, %v1026
    %v1028 = vsub.f32 1.0, %v1027
    %v1029 = vmul.f32 %v1026, %v1028
    %v1030 = vadd.f32 %v1026, %v1029
    %vm1031 = vweird.f32 %v1025
    %vm1032 = vweird.f32 %v1026
    %vm1033 = vmor %vm1031, %vm1032
    %v1034 = vsel %vm1033, %v1026, %v1030
    %v1035 = vand.u32 2147483647, %v1025
    %vm1036 = vcmp.eq.f32.partialorder %v1035, 8.507059e+37
    %v1037 = vand.u32 %v1025, 2147483648
    %v1038 = vor.u32 1.1754944e-38, %v1037
    %v1039 = vsel %vm1036, %v1038, %v1034
    %v1040 = vmul.f32 1.0, %v1039
    %v1041 = vtanh.pop %v1021
    %v1043 = vrot.slane %v985, 6
    %v1045 = vmul.f32 %v1040, %v1043
    %1047 = vrot.lane.b32.xlu0 %v1041, 64
    %v1048 = vpop.permute.xlu0 %1047
    %v1050 = vmul.f32 %v1040, %v1048
    %1052 = vrot.lane.b32.xlu0 %v1050, 32
    %v1053 = vpop.permute.xlu0 %1052
    %v1055 = vadd.f32 %v1045, %v1053
    %v1056 = vtanh.pop %v1055
    %1058 = vrot.lane.b32.xlu0 %v1056, 64
    %v1059 = vpop.permute.xlu0 %1058
    %v1061 = vmul.f32 %v1040, %v1059
    %v1063 = vrot.slane %v1061, 6
    %1064 = vrot.lane.b32.xlu0 %v1063, 32
    %v1065 = vpop.permute.xlu0 %1064
    %v1066 = vsel %vm68, %v1065, 0
    %1068 = vmatpush.msra.mxu0 0.0
    %1069 = vmatpush.msra.mxu0 0.0
    %1070 = vmatpush.msra.mxu0 0.0
    %1071 = vmatpush.msra.mxu0 0.0
    %1072 = vmatpush.msra.mxu0 0.0
    %1073 = vmatpush.msra.mxu0 0.0
    %1074 = vmatpush.msra.mxu0 0.0
    %1075 = vmatpush.msra.mxu0 0.0
    %1076 = vmatpush.msra.mxu0 0.0
    %1077 = vmatpush.msra.mxu0 0.0
    %1078 = vmatpush.msra.mxu0 0.0
    %1079 = vmatpush.msra.mxu0 0.0
    %1080 = vmatpush.msra.mxu0 %v761
    %1081 = vmatpush.msra.mxu0 %v760
    %1082 = vmatpush.msra.mxu0 %v759
    %1083 = vmatpush.msra.mxu0 %v758
    %1084 = vmatmul.f32.gmra.mxu0 %v1066
    %v1085 = vpop.f32.mrf.mxu0
    %v1086 = vadd.f32 0.0, %v1085
    %1087 = vdwg.mxu0
    %v1088 = vadd.f32 %v793, %v1086
    %v1089 = vxor.u32 %v1088, 2147483648
    %v1090 = vmul.f32 %v1089, 1.442695
    %v1091 = vpow.pop %v1090
    %v1092 = vadd.f32 %v1091, 1.0
    %v1093 = vrcp.pop %v1092
    %v1094 = vmul.f32 %v1092, %v1093
    %v1095 = vsub.f32 1.0, %v1094
    %v1096 = vmul.f32 %v1093, %v1095
    %v1097 = vadd.f32 %v1093, %v1096
    %vm1098 = vweird.f32 %v1092
    %vm1099 = vweird.f32 %v1093
    %vm1100 = vmor %vm1098, %vm1099
    %v1101 = vsel %vm1100, %v1093, %v1097
    %v1102 = vand.u32 2147483647, %v1092
    %vm1103 = vcmp.eq.f32.partialorder %v1102, 8.507059e+37
    %v1104 = vand.u32 %v1092, 2147483648
    %v1105 = vor.u32 1.1754944e-38, %v1104
    %v1106 = vsel %vm1103, %v1105, %v1101
    %v1107 = vmul.f32 1.0, %v1106
    %v1108 = vtanh.pop %v1088
    %v1110 = vrot.slane %v1055, 6
    %v1112 = vmul.f32 %v1107, %v1110
    %1114 = vrot.lane.b32.xlu0 %v1108, 64
    %v1115 = vpop.permute.xlu0 %1114
    %v1117 = vmul.f32 %v1107, %v1115
    %1119 = vrot.lane.b32.xlu0 %v1117, 32
    %v1120 = vpop.permute.xlu0 %1119
    %v1122 = vadd.f32 %v1112, %v1120
    %v1123 = vtanh.pop %v1122
    %1125 = vrot.lane.b32.xlu0 %v1123, 64
    %v1126 = vpop.permute.xlu0 %1125
    %v1128 = vmul.f32 %v1107, %v1126
    %1130 = vrot.lane.b32.xlu0 %v1128, 32
    %v1131 = vpop.permute.xlu0 %1130
    %v1132 = vsel %vm68, %v1131, 0
    %1134 = vmatpush.msra.mxu0 0.0
    %1135 = vmatpush.msra.mxu0 0.0
    %1136 = vmatpush.msra.mxu0 0.0
    %1137 = vmatpush.msra.mxu0 0.0
    %1138 = vmatpush.msra.mxu0 0.0
    %1139 = vmatpush.msra.mxu0 0.0
    %1140 = vmatpush.msra.mxu0 0.0
    %1141 = vmatpush.msra.mxu0 0.0
    %1142 = vmatpush.msra.mxu0 0.0
    %1143 = vmatpush.msra.mxu0 0.0
    %1144 = vmatpush.msra.mxu0 0.0
    %1145 = vmatpush.msra.mxu0 0.0
    %1146 = vmatpush.msra.mxu0 %v761
    %1147 = vmatpush.msra.mxu0 %v760
    %1148 = vmatpush.msra.mxu0 %v759
    %1149 = vmatpush.msra.mxu0 %v758
    %1150 = vmatmul.f32.gmra.mxu0 %v1132
    %v1151 = vpop.f32.mrf.mxu0
    %v1152 = vadd.f32 0.0, %v1151
    %1153 = vdwg.mxu0
    %v1155 = vrot.slane %v1152, 6
    %v1157 = vadd.f32 %v793, %v1155
    %v1158 = vxor.u32 %v1157, 2147483648
    %v1159 = vmul.f32 %v1158, 1.442695
    %v1160 = vpow.pop %v1159
    %v1161 = vadd.f32 %v1160, 1.0
    %v1162 = vrcp.pop %v1161
    %v1163 = vmul.f32 %v1161, %v1162
    %v1164 = vsub.f32 1.0, %v1163
    %v1165 = vmul.f32 %v1162, %v1164
    %v1166 = vadd.f32 %v1162, %v1165
    %vm1167 = vweird.f32 %v1161
    %vm1168 = vweird.f32 %v1162
    %vm1169 = vmor %vm1167, %vm1168
    %v1170 = vsel %vm1169, %v1162, %v1166
    %v1171 = vand.u32 2147483647, %v1161
    %vm1172 = vcmp.eq.f32.partialorder %v1171, 8.507059e+37
    %v1173 = vand.u32 %v1161, 2147483648
    %v1174 = vor.u32 1.1754944e-38, %v1173
    %v1175 = vsel %vm1172, %v1174, %v1170
    %v1176 = vmul.f32 1.0, %v1175
    %v1177 = vtanh.pop %v1157
    %v1179 = vrot.slane %v1122, 6
    %v1181 = vmul.f32 %v1176, %v1179
    %1183 = vrot.lane.b32.xlu0 %v1177, 64
    %v1184 = vpop.permute.xlu0 %1183
    %v1186 = vmul.f32 %v1176, %v1184
    %1188 = vrot.lane.b32.xlu0 %v1186, 32
    %v1189 = vpop.permute.xlu0 %1188
    %v1191 = vadd.f32 %v1181, %v1189
    %v1192 = vtanh.pop %v1191
    %1194 = vrot.lane.b32.xlu0 %v1192, 64
    %v1195 = vpop.permute.xlu0 %1194
    %v1197 = vmul.f32 %v1176, %v1195
    %v1199 = vrot.slane %v1197, 2
    %1200 = vrot.lane.b32.xlu0 %v1199, 32
    %v1201 = vpop.permute.xlu0 %1200
    %v1202 = vsel %vm68, %v1201, 0
    %1204 = vmatpush.msra.mxu0 0.0
    %1205 = vmatpush.msra.mxu0 0.0
    %1206 = vmatpush.msra.mxu0 0.0
    %1207 = vmatpush.msra.mxu0 0.0
    %1208 = vmatpush.msra.mxu0 0.0
    %1209 = vmatpush.msra.mxu0 0.0
    %1210 = vmatpush.msra.mxu0 0.0
    %1211 = vmatpush.msra.mxu0 0.0
    %1212 = vmatpush.msra.mxu0 0.0
    %1213 = vmatpush.msra.mxu0 0.0
    %1214 = vmatpush.msra.mxu0 0.0
    %1215 = vmatpush.msra.mxu0 0.0
    %1216 = vmatpush.msra.mxu0 %v761
    %1217 = vmatpush.msra.mxu0 %v760
    %1218 = vmatpush.msra.mxu0 %v759
    %1219 = vmatpush.msra.mxu0 %v758
    %1220 = vmatmul.f32.gmra.mxu0 %v1202
    %v1221 = vpop.f32.mrf.mxu0
    %v1222 = vadd.f32 0.0, %v1221
    %1223 = vdwg.mxu0
    %v1225 = vrot.slane %v1222, 4
    %v1227 = vadd.f32 %v793, %v1225
    %v1228 = vxor.u32 %v1227, 2147483648
    %v1229 = vmul.f32 %v1228, 1.442695
    %v1230 = vpow.pop %v1229
    %v1231 = vadd.f32 %v1230, 1.0
    %v1232 = vrcp.pop %v1231
    %v1233 = vmul.f32 %v1231, %v1232
    %v1234 = vsub.f32 1.0, %v1233
    %v1235 = vmul.f32 %v1232, %v1234
    %v1236 = vadd.f32 %v1232, %v1235
    %vm1237 = vweird.f32 %v1231
    %vm1238 = vweird.f32 %v1232
    %vm1239 = vmor %vm1237, %vm1238
    %v1240 = vsel %vm1239, %v1232, %v1236
    %v1241 = vand.u32 2147483647, %v1231
    %vm1242 = vcmp.eq.f32.partialorder %v1241, 8.507059e+37
    %v1243 = vand.u32 %v1231, 2147483648
    %v1244 = vor.u32 1.1754944e-38, %v1243
    %v1245 = vsel %vm1242, %v1244, %v1240
    %v1246 = vmul.f32 1.0, %v1245
    %v1247 = vtanh.pop %v1227
    %v1249 = vrot.slane %v1191, 6
    %v1251 = vmul.f32 %v1246, %v1249
    %1253 = vrot.lane.b32.xlu0 %v1247, 64
    %v1254 = vpop.permute.xlu0 %1253
    %v1256 = vmul.f32 %v1246, %v1254
    %1258 = vrot.lane.b32.xlu0 %v1256, 32
    %v1259 = vpop.permute.xlu0 %1258
    %v1261 = vadd.f32 %v1251, %v1259
    %v1262 = vtanh.pop %v1261
    %1264 = vrot.lane.b32.xlu0 %v1262, 64
    %v1265 = vpop.permute.xlu0 %1264
    %v1267 = vmul.f32 %v1246, %v1265
    %v1269 = vrot.slane %v1267, 4
    %1270 = vrot.lane.b32.xlu0 %v1269, 32
    %v1271 = vpop.permute.xlu0 %1270
    %v1272 = vsel %vm68, %v1271, 0
    %1274 = vmatpush.msra.mxu0 0.0
    %1275 = vmatpush.msra.mxu0 0.0
    %1276 = vmatpush.msra.mxu0 0.0
    %1277 = vmatpush.msra.mxu0 0.0
    %1278 = vmatpush.msra.mxu0 0.0
    %1279 = vmatpush.msra.mxu0 0.0
    %1280 = vmatpush.msra.mxu0 0.0
    %1281 = vmatpush.msra.mxu0 0.0
    %1282 = vmatpush.msra.mxu0 0.0
    %1283 = vmatpush.msra.mxu0 0.0
    %1284 = vmatpush.msra.mxu0 0.0
    %1285 = vmatpush.msra.mxu0 0.0
    %1286 = vmatpush.msra.mxu0 %v761
    %1287 = vmatpush.msra.mxu0 %v760
    %1288 = vmatpush.msra.mxu0 %v759
    %1289 = vmatpush.msra.mxu0 %v758
    %1290 = vmatmul.f32.gmra.mxu0 %v1272
    %v1291 = vpop.f32.mrf.mxu0
    %v1292 = vadd.f32 0.0, %v1291
    %1293 = vdwg.mxu0
    %v1295 = vrot.slane %v1292, 2
    %v1297 = vadd.f32 %v793, %v1295
    %v1298 = vxor.u32 %v1297, 2147483648
    %v1299 = vmul.f32 %v1298, 1.442695
    %v1300 = vpow.pop %v1299
    %v1301 = vadd.f32 %v1300, 1.0
    %v1302 = vrcp.pop %v1301
    %v1303 = vmul.f32 %v1301, %v1302
    %v1304 = vsub.f32 1.0, %v1303
    %v1305 = vmul.f32 %v1302, %v1304
    %v1306 = vadd.f32 %v1302, %v1305
    %vm1307 = vweird.f32 %v1301
    %vm1308 = vweird.f32 %v1302
    %vm1309 = vmor %vm1307, %vm1308
    %v1310 = vsel %vm1309, %v1302, %v1306
    %v1311 = vand.u32 2147483647, %v1301
    %vm1312 = vcmp.eq.f32.partialorder %v1311, 8.507059e+37
    %v1313 = vand.u32 %v1301, 2147483648
    %v1314 = vor.u32 1.1754944e-38, %v1313
    %v1315 = vsel %vm1312, %v1314, %v1310
    %v1316 = vmul.f32 1.0, %v1315
    %v1317 = vtanh.pop %v1297
    %v1319 = vrot.slane %v1261, 6
    %v1321 = vmul.f32 %v1316, %v1319
    %1323 = vrot.lane.b32.xlu0 %v1317, 64
    %v1324 = vpop.permute.xlu0 %1323
    %v1326 = vmul.f32 %v1316, %v1324
    %1328 = vrot.lane.b32.xlu0 %v1326, 32
    %v1329 = vpop.permute.xlu0 %1328
    %v1331 = vadd.f32 %v1321, %v1329
    %v1332 = vtanh.pop %v1331
    %1334 = vrot.lane.b32.xlu0 %v1332, 64
    %v1335 = vpop.permute.xlu0 %1334
    %v1337 = vmul.f32 %v1316, %v1335
    %vm1338 = vcmp.eq.s32.totalorder %v53, 0
    %v1339 = vsel %vm1338, 1, 0
    %1340 = vset.pattern.permute.xlu0 0
    %1341 = vperm.xlu0 %1340, %v1339
    %v1342 = vpop.permute.xlu0 %1341
    %vm1343 = vcmp.eq.s32.totalorder %v1342, 1
    %v1344 = vsel %vm1343, %v852, 0.0
    %vm1345 = vcmp.eq.s32.totalorder %v53, 1
    %v1346 = vsel %vm1345, 1, 0
    %1347 = vset.pattern.permute.xlu0 0
    %1348 = vperm.xlu0 %1347, %v1346
    %v1349 = vpop.permute.xlu0 %1348
    %vm1350 = vcmp.eq.s32.totalorder %v1349, 1
    %1353 = vrot.lane.b32.xlu0 %v1344, 32
    %v1354 = vpop.permute.xlu0 %1353
    %v1356 = vsel %vm1350, %v925, %v1354
    %vm1357 = vcmp.eq.s32.totalorder %v53, 2
    %v1358 = vsel %vm1357, 1, 0
    %1359 = vset.pattern.permute.xlu0 0
    %1360 = vperm.xlu0 %1359, %v1358
    %v1361 = vpop.permute.xlu0 %1360
    %vm1362 = vcmp.eq.s32.totalorder %v1361, 1
    %v1364 = vsel %vm1362, %v995, %v1356
    %vm1365 = vcmp.eq.s32.totalorder %v53, 3
    %v1366 = vsel %vm1365, 1, 0
    %1367 = vset.pattern.permute.xlu0 0
    %1368 = vperm.xlu0 %1367, %v1366
    %v1369 = vpop.permute.xlu0 %1368
    %vm1370 = vcmp.eq.s32.totalorder %v1369, 1
    %v1372 = vsel %vm1370, %v1065, %v1364
    %vm1373 = vcmp.eq.s32.totalorder %v53, 4
    %v1374 = vsel %vm1373, 1, 0
    %1375 = vset.pattern.permute.xlu0 0
    %1376 = vperm.xlu0 %1375, %v1374
    %v1377 = vpop.permute.xlu0 %1376
    %vm1378 = vcmp.eq.s32.totalorder %v1377, 1
    %1380 = vrot.lane.b32.xlu0 %v1372, 96
    %v1381 = vpop.permute.xlu0 %1380
    %v1383 = vsel %vm1378, %v1128, %v1381
    %vm1384 = vcmp.eq.s32.totalorder %v53, 5
    %v1385 = vsel %vm1384, 1, 0
    %1386 = vset.pattern.permute.xlu0 0
    %1387 = vperm.xlu0 %1386, %v1385
    %v1388 = vpop.permute.xlu0 %1387
    %vm1389 = vcmp.eq.s32.totalorder %v1388, 1
    %1392 = vrot.lane.b32.xlu0 %v1383, 32
    %v1393 = vpop.permute.xlu0 %1392
    %v1395 = vsel %vm1389, %v1201, %v1393
    %vm1396 = vcmp.eq.s32.totalorder %v53, 6
    %v1397 = vsel %vm1396, 1, 0
    %1398 = vset.pattern.permute.xlu0 0
    %1399 = vperm.xlu0 %1398, %v1397
    %v1400 = vpop.permute.xlu0 %1399
    %vm1401 = vcmp.eq.s32.totalorder %v1400, 1
    %v1403 = vsel %vm1401, %v1271, %v1395
    %vm1404 = vcmp.eq.s32.totalorder %v53, 7
    %v1405 = vsel %vm1404, 1, 0
    %1406 = vset.pattern.permute.xlu0 0
    %1407 = vperm.xlu0 %1406, %v1405
    %v1408 = vpop.permute.xlu0 %1407
    %vm1409 = vcmp.eq.s32.totalorder %v1408, 1
    %v1411 = vrot.slane %v1337, 6
    %1412 = vrot.lane.b32.xlu0 %v1411, 32
    %v1413 = vpop.permute.xlu0 %1412
    %v1415 = vsel %vm1409, %v1413, %v1403
    %v1416 = vld [vmem:[%s11] sm:$0xff]
    %v1417 = vld [vmem:[%s11 + $0x8] sm:$0xff]
    %v1418 = vld [vmem:[%s11 + $0x10] sm:$0xff]
    %v1419 = vld [vmem:[%s11 + $0x18] sm:$0xff]
    %v1420 = vld [vmem:[%s12] sm:$0x1]
    %v1422 = vperm.slane %v1420, 0
    %v1425 = vsel %vm68, %v1415, 0
    %1427 = vmatpush.msra.mxu0 0.0
    %1428 = vmatpush.msra.mxu0 0.0
    %1429 = vmatpush.msra.mxu0 0.0
    %1430 = vmatpush.msra.mxu0 0.0
    %1431 = vmatpush.msra.mxu0 0.0
    %1432 = vmatpush.msra.mxu0 0.0
    %1433 = vmatpush.msra.mxu0 0.0
    %1434 = vmatpush.msra.mxu0 0.0
    %1435 = vmatpush.msra.mxu0 0.0
    %1436 = vmatpush.msra.mxu0 0.0
    %1437 = vmatpush.msra.mxu0 0.0
    %1438 = vmatpush.msra.mxu0 0.0
    %1439 = vmatpush.msra.mxu0 %v1419
    %1440 = vmatpush.msra.mxu0 %v1418
    %1441 = vmatpush.msra.mxu0 %v1417
    %1442 = vmatpush.msra.mxu0 %v1416
    %1443 = vmatmul.f32.gmra.mxu0 %v1425
    %v1444 = vpop.f32.mrf.mxu0
    %v1445 = vadd.f32 %v1422, %v1444
    %1446 = vdwg.mxu0
    %v1447 = vmax.f32 %v1445, 0.0
    %v1448 = vld [vmem:[%s13] sm:$0xff]
    %v1449 = vld [vmem:[%s13 + $0x8] sm:$0xff]
    %v1450 = vld [vmem:[%s13 + $0x10] sm:$0xff]
    %v1451 = vld [vmem:[%s13 + $0x18] sm:$0xff]
    %v1452 = vld [vmem:[%s13 + $0x20] sm:$0xff]
    %v1453 = vld [vmem:[%s13 + $0x28] sm:$0xff]
    %v1454 = vld [vmem:[%s13 + $0x30] sm:$0xff]
    %v1455 = vld [vmem:[%s13 + $0x38] sm:$0xff]
    %v1456 = vld [vmem:[%s13 + $0x40] sm:$0xff]
    %v1457 = vld [vmem:[%s13 + $0x48] sm:$0xff]
    %v1458 = vld [vmem:[%s13 + $0x50] sm:$0xff]
    %v1459 = vld [vmem:[%s13 + $0x58] sm:$0xff]
    %v1460 = vld [vmem:[%s13 + $0x60] sm:$0xff]
    %v1461 = vld [vmem:[%s13 + $0x68] sm:$0xff]
    %v1462 = vld [vmem:[%s13 + $0x70] sm:$0xff]
    %v1463 = vld [vmem:[%s13 + $0x78] sm:$0xff]
    %v1464 = vld [vmem:[%s14] sm:$0x1]
    %v1466 = vperm.slane %v1464, 0
    %1468 = vmatpush.msra.mxu0 %v1463
    %1469 = vmatpush.msra.mxu0 %v1462
    %1470 = vmatpush.msra.mxu0 %v1461
    %1471 = vmatpush.msra.mxu0 %v1460
    %1472 = vmatpush.msra.mxu0 %v1459
    %1473 = vmatpush.msra.mxu0 %v1458
    %1474 = vmatpush.msra.mxu0 %v1457
    %1475 = vmatpush.msra.mxu0 %v1456
    %1476 = vmatpush.msra.mxu0 %v1455
    %1477 = vmatpush.msra.mxu0 %v1454
    %1478 = vmatpush.msra.mxu0 %v1453
    %1479 = vmatpush.msra.mxu0 %v1452
    %1480 = vmatpush.msra.mxu0 %v1451
    %1481 = vmatpush.msra.mxu0 %v1450
    %1482 = vmatpush.msra.mxu0 %v1449
    %1483 = vmatpush.msra.mxu0 %v1448
    %1484 = vmatmul.f32.gmra.mxu0 %v1447
    %v1485 = vpop.f32.mrf.mxu0
    %v1486 = vadd.f32 %v1466, %v1485
    %1487 = vdwg.mxu0
    %vm1488 = vcmask 9216
    %v1489 = vsel %vm1488, %v1486, -inf
    %1490 = vmax.xlane.f32.xlu0 %v1489
    %v1491 = vpop.xlane.xlu0 %1490
    %v1492 = vsub.f32 %v1486, %v1491
    %v1493 = vmul.f32 %v1492, 1.442695
    %v1494 = vpow.pop %v1493
    %v1495 = vsel %vm1488, %v1494, 0.0
    %1496 = vadd.xlane.f32.xlu0 %v1495
    %v1497 = vpop.xlane.xlu0 %1496
    %v1498 = vlog2.pop %v1497
    %v1499 = vmul.f32 %v1498, 0.6931472
    %v1500 = vsub.f32 %v1492, %v1499
    %1501 = vst.msk [vmem:[#allocation3] sm:$0x3] %vm1488, %v1500
    // Predicated region
    $region62: #{sst2_forward.1} parent=1 // pred_check
      _
    $region63: #{sst2_forward.1} parent=1 // pred_check_branch
      %1503 = sbr.rel (0) target = $region65
    $region64: #{sst2_forward.1} parent=1 // pred_region
      %1505 = vsyncadd [#allocation4], 0
      %s1507 = sshll.u32 [#allocation3], 4
      %s1508 = int_to_ptr.vmem [resolvable:$true] %s1507
      %s1509 = sshll.u32 %s15, 4
      %s1510 = int_to_ptr.hbm [resolvable:$true] %s1509
      %1512 = dma.vmem_to_hbm [thread:$0]  %s1508, 32, %s1510, [#allocation4]
    $region65: #{sst2_forward.1} parent=1 // pred_fallthru
      _
    // Predicated region
    $region66: #{sst2_forward.1} parent=1 // pred_check
      _
    $region67: #{sst2_forward.1} parent=1 // pred_check_branch
      %1514 = sbr.rel (0) target = $region69
    $region68: #{sst2_forward.1} parent=1 // pred_region
      %1516 = dma.done [#allocation4], 32
    $region69: #{sst2_forward.1} parent=1 // pred_fallthru
      _
    %1517 = vsyncpa [#allocation4], 1

</llo_original>
